<compile_context>
chip_gen: v5e
topology: v5e:2x2
jax: 0.10.0
libtpu: 0.0.40
codegen_flags: <defaults>
</compile_context>

<pallas_src>
import functools

import jax
import jax.numpy as jnp
import numpy as np
from jax.experimental import pallas as pl
from jax.experimental.pallas import tpu as pltpu


def _fused_backbone_kernel(x1_ref, w1_ref, b1_ref, w2_ref, b2_ref,
                           wfc_ref, bfc_ref, o_ref, *, N, H, W, C1, C2):
    """conv1 -> ReLU -> conv2 -> ReLU -> GAP -> FC, fully fused in VMEM."""
    M = N * H * W
    inv_hw = 1.0 / float(H * W)

    # ---- conv1: one im2col matmul (M, 9*Cin) @ (9*Cin, C1) + bias + ReLU --
    y1 = jnp.dot(x1_ref[...], w1_ref[...], preferred_element_type=jnp.float32)
    y1 = jnp.maximum(y1 + b1_ref[...], 0.0)                        # (M, C1)

    # ---- conv2: build the 9 shifted patches from values (no HBM round
    # trip), concatenate along channels and do ONE deep-K matmul instead of
    # nine shallow accumulating dots. ---------------------------------------
    y1_img = y1.reshape(N, H, W, C1)
    zrow = jnp.zeros((N, 1, W, C1), jnp.float32)
    y1_pad = jnp.concatenate([zrow, y1_img, zrow], axis=1)         # (N,H+2,W,C1)
    zcol = jnp.zeros((N, H + 2, 1, C1), jnp.float32)
    y1_pad = jnp.concatenate([zcol, y1_pad, zcol], axis=2)         # (N,H+2,W+2,C1)

    patches = [
        y1_pad[:, kh:kh + H, kw:kw + W, :].reshape(M, C1)
        for kh in range(3) for kw in range(3)
    ]
    x2 = jnp.concatenate(patches, axis=-1)                         # (M, 9*C1)

    y2 = jnp.dot(x2, w2_ref[...], preferred_element_type=jnp.float32)
    y2 = jnp.maximum(y2 + b2_ref[...], 0.0)                        # (M, C2)

    # ---- head: global average pool + linear classifier (lane-padded) ------
    pooled = jnp.concatenate(
        [jnp.sum(y2[n * H * W:(n + 1) * H * W, :], axis=0, keepdims=True)
         for n in range(N)], axis=0) * inv_hw                      # (N, C2)
    logits = jnp.dot(pooled, wfc_ref[...],
                     preferred_element_type=jnp.float32) + bfc_ref[...]
    o_ref[...] = logits.astype(o_ref.dtype)                        # (N, 128)


def pretrained_forward(x_nchw, params):
    """Forward pass of the synthetic `Pretrained` backbone (features_only=False)."""
    # TODO(synk): timm.create_model would load an arbitrary pretrained
    # architecture; this is a deterministic synthetic stand-in with the same
    # conventions (NCHW image in, (N, num_classes) logits out).
    w1, b1 = params["w1"], params["b1"]
    w2, b2 = params["w2"], params["b2"]
    wfc, bfc = params["wfc"], params["bfc"]

    N, Cin, H, W = x_nchw.shape
    C1, C2, K = w1.shape[-1], w2.shape[-1], wfc.shape[-1]
    KP = 128                      # pad classes -> lane-dense output store
    M = N * H * W

    # Wrapper-side (plain XLA, runs once): NCHW->NHWC, SAME halo, im2col for
    # conv1, weight flattening and zero-padding.  Zero channel / class
    # padding is mathematically neutral.
    x = jnp.transpose(x_nchw, (0, 2, 3, 1))
    cin_p = max(8, Cin)
    if cin_p != Cin:
        x = jnp.pad(x, ((0, 0), (0, 0), (0, 0), (0, cin_p - Cin)))
        w1 = jnp.pad(w1, ((0, 0), (0, 0), (0, cin_p - Cin), (0, 0)))
    xp = jnp.pad(x, ((0, 0), (1, 1), (1, 1), (0, 0)))
    x1 = jnp.concatenate(
        [xp[:, kh:kh + H, kw:kw + W, :] for kh in range(3) for kw in range(3)],
        axis=-1).reshape(M, 9 * cin_p)                             # (M, 9*Cin_p)

    w1f = w1.reshape(9 * cin_p, C1)
    w2f = w2.reshape(9 * C1, C2)
    wfc_p = jnp.pad(wfc, ((0, 0), (0, KP - K)))
    bfc_p = jnp.pad(bfc, (0, KP - K)).reshape(1, KP)

    flops = 2 * (M * (9 * cin_p) * C1 + M * (9 * C1) * C2 + N * C2 * KP)
    bytes_accessed = 4 * (x1.size + w1f.size + C1 + w2f.size + C2
                          + wfc_p.size + KP + N * KP)

    kernel = functools.partial(_fused_backbone_kernel,
                               N=N, H=H, W=W, C1=C1, C2=C2)
    vmem = lambda: pl.BlockSpec(memory_space=pltpu.MemorySpace.VMEM)

    logits_p = pl.pallas_call(
        kernel,
        out_shape=jax.ShapeDtypeStruct((N, KP), x_nchw.dtype),
        in_specs=[vmem() for _ in range(7)],
        out_specs=vmem(),
        cost_estimate=pl.CostEstimate(flops=int(flops), transcendentals=0,
                                      bytes_accessed=int(bytes_accessed)),
    )(x1, w1f, b1.reshape(1, C1), w2f, b2.reshape(1, C2), wfc_p, bfc_p)
    return logits_p[:, :K]


# ------------------------------ reference -----------------------------------

def _reference(x_nchw, params):
    x = jnp.transpose(x_nchw, (0, 2, 3, 1))

    def conv(x, w, b):
        y = jax.lax.conv_general_dilated(
            x, w, window_strides=(1, 1), padding="SAME",
            dimension_numbers=("NHWC", "HWIO", "NHWC"))
        return jax.nn.relu(y + b)

    x = conv(x, params["w1"], params["b1"])
    x = conv(x, params["w2"], params["b2"])
    pooled = jnp.mean(x, axis=(1, 2))
    return pooled @ params["wfc"] + params["bfc"]


# -------------------------------- main ---------------------------------------

if __name__ == "__main__":
    key = jax.random.PRNGKey(0)
    ks = jax.random.split(key, 6)

    # timm/torch convention: NCHW, 3-channel image.
    x = jax.random.normal(ks[0], (2, 3, 16, 16), jnp.float32)

    params = dict(
        w1=jax.random.normal(ks[1], (3, 3, 3, 16), jnp.float32) * 0.1,
        b1=jax.random.normal(ks[2], (16,), jnp.float32) * 0.1,
        w2=jax.random.normal(ks[3], (3, 3, 16, 32), jnp.float32) * 0.1,
        b2=jax.random.normal(ks[4], (32,), jnp.float32) * 0.1,
        wfc=jax.random.normal(ks[5], (32, 10), jnp.float32) * 0.1,
        bfc=jnp.zeros((10,), jnp.float32),
    )

    out = jax.jit(pretrained_forward)(x, params)
    out = jax.block_until_ready(out)
    assert out.shape == (2, 10)

    ref = jax.block_until_ready(_reference(x, params))
    np.testing.assert_allclose(np.asarray(out), np.asarray(ref),
                               rtol=1e-4, atol=1e-4)
    print("KERNEL_OK")
</pallas_src>

<mosaic_0001>
module attributes {stable_mosaic.version = 11 : i64} {
  func.func @_fused_backbone_kernel(%arg0: memref<512x72xf32, #tpu.memory_space<vmem>>, %arg1: memref<72x16xf32, #tpu.memory_space<vmem>>, %arg2: memref<1x16xf32, #tpu.memory_space<vmem>>, %arg3: memref<144x32xf32, #tpu.memory_space<vmem>>, %arg4: memref<1x32xf32, #tpu.memory_space<vmem>>, %arg5: memref<32x128xf32, #tpu.memory_space<vmem>>, %arg6: memref<1x128xf32, #tpu.memory_space<vmem>>, %arg7: memref<2x128xf32, #tpu.memory_space<vmem>>) attributes {dimension_semantics = [], scalar_prefetch = 0 : i64, scratch_operands = 0 : i64, tpu.core_type = #tpu.core_type<tc>} {
    %c0 = arith.constant 0 : index
    %c0_0 = arith.constant 0 : index
    %0 = vector.load %arg0[%c0, %c0_0] : memref<512x72xf32, #tpu.memory_space<vmem>>, vector<512x72xf32>
    %c0_1 = arith.constant 0 : index
    %c0_2 = arith.constant 0 : index
    %1 = vector.load %arg1[%c0_1, %c0_2] : memref<72x16xf32, #tpu.memory_space<vmem>>, vector<72x16xf32>
    %cst = arith.constant dense<0.000000e+00> : vector<512x16xf32>
    %2 = tpu.matmul %0, %1, %cst {dimension_numbers = #tpu.dot_dimension_numbers<[1], [0], [0], [1], [0, 0, 1, 1], [], []>} : vector<512x72xf32>, vector<72x16xf32>, vector<512x16xf32> -> vector<512x16xf32>
    %c0_3 = arith.constant 0 : index
    %c0_4 = arith.constant 0 : index
    %3 = vector.load %arg2[%c0_3, %c0_4] : memref<1x16xf32, #tpu.memory_space<vmem>>, vector<1x16xf32>
    %4 = vector.broadcast %3 : vector<1x16xf32> to vector<512x16xf32>
    %5 = arith.addf %2, %4 : vector<512x16xf32>
    %cst_5 = arith.constant 0.000000e+00 : f32
    %6 = vector.broadcast %cst_5 : f32 to vector<512x16xf32>
    %7 = arith.maximumf %5, %6 : vector<512x16xf32>
    %8 = vector.shape_cast %7 : vector<512x16xf32> to vector<2x16x16x16xf32>
    %cst_6 = arith.constant 0.000000e+00 : f32
    %9 = vector.broadcast %cst_6 : f32 to vector<2x1x16x16xf32>
    %10 = tpu.concatenate %9, %8, %9 in 1 : vector<2x1x16x16xf32>, vector<2x16x16x16xf32>, vector<2x1x16x16xf32> -> vector<2x18x16x16xf32>
    %cst_7 = arith.constant 0.000000e+00 : f32
    %11 = vector.broadcast %cst_7 : f32 to vector<2x18x1x16xf32>
    %12 = tpu.concatenate %11, %10, %11 in 2 : vector<2x18x1x16xf32>, vector<2x18x16x16xf32>, vector<2x18x1x16xf32> -> vector<2x18x18x16xf32>
    %13 = vector.extract_strided_slice %12 {offsets = [0, 0, 0, 0], sizes = [2, 16, 16, 16], strides = [1, 1, 1, 1]} : vector<2x18x18x16xf32> to vector<2x16x16x16xf32>
    %14 = vector.shape_cast %13 : vector<2x16x16x16xf32> to vector<512x16xf32>
    %15 = vector.extract_strided_slice %12 {offsets = [0, 0, 1, 0], sizes = [2, 16, 16, 16], strides = [1, 1, 1, 1]} : vector<2x18x18x16xf32> to vector<2x16x16x16xf32>
    %16 = vector.shape_cast %15 : vector<2x16x16x16xf32> to vector<512x16xf32>
    %17 = vector.extract_strided_slice %12 {offsets = [0, 0, 2, 0], sizes = [2, 16, 16, 16], strides = [1, 1, 1, 1]} : vector<2x18x18x16xf32> to vector<2x16x16x16xf32>
    %18 = vector.shape_cast %17 : vector<2x16x16x16xf32> to vector<512x16xf32>
    %19 = vector.extract_strided_slice %12 {offsets = [0, 1, 0, 0], sizes = [2, 16, 16, 16], strides = [1, 1, 1, 1]} : vector<2x18x18x16xf32> to vector<2x16x16x16xf32>
    %20 = vector.shape_cast %19 : vector<2x16x16x16xf32> to vector<512x16xf32>
    %21 = vector.extract_strided_slice %12 {offsets = [0, 1, 1, 0], sizes = [2, 16, 16, 16], strides = [1, 1, 1, 1]} : vector<2x18x18x16xf32> to vector<2x16x16x16xf32>
    %22 = vector.shape_cast %21 : vector<2x16x16x16xf32> to vector<512x16xf32>
    %23 = vector.extract_strided_slice %12 {offsets = [0, 1, 2, 0], sizes = [2, 16, 16, 16], strides = [1, 1, 1, 1]} : vector<2x18x18x16xf32> to vector<2x16x16x16xf32>
    %24 = vector.shape_cast %23 : vector<2x16x16x16xf32> to vector<512x16xf32>
    %25 = vector.extract_strided_slice %12 {offsets = [0, 2, 0, 0], sizes = [2, 16, 16, 16], strides = [1, 1, 1, 1]} : vector<2x18x18x16xf32> to vector<2x16x16x16xf32>
    %26 = vector.shape_cast %25 : vector<2x16x16x16xf32> to vector<512x16xf32>
    %27 = vector.extract_strided_slice %12 {offsets = [0, 2, 1, 0], sizes = [2, 16, 16, 16], strides = [1, 1, 1, 1]} : vector<2x18x18x16xf32> to vector<2x16x16x16xf32>
    %28 = vector.shape_cast %27 : vector<2x16x16x16xf32> to vector<512x16xf32>
    %29 = vector.extract_strided_slice %12 {offsets = [0, 2, 2, 0], sizes = [2, 16, 16, 16], strides = [1, 1, 1, 1]} : vector<2x18x18x16xf32> to vector<2x16x16x16xf32>
    %30 = vector.shape_cast %29 : vector<2x16x16x16xf32> to vector<512x16xf32>
    %31 = tpu.concatenate %14, %16, %18, %20, %22, %24, %26, %28, %30 in 1 : vector<512x16xf32>, vector<512x16xf32>, vector<512x16xf32>, vector<512x16xf32>, vector<512x16xf32>, vector<512x16xf32>, vector<512x16xf32>, vector<512x16xf32>, vector<512x16xf32> -> vector<512x144xf32>
    %c0_8 = arith.constant 0 : index
    %c0_9 = arith.constant 0 : index
    %32 = vector.load %arg3[%c0_8, %c0_9] : memref<144x32xf32, #tpu.memory_space<vmem>>, vector<144x32xf32>
    %cst_10 = arith.constant dense<0.000000e+00> : vector<512x32xf32>
    %33 = tpu.matmul %31, %32, %cst_10 {dimension_numbers = #tpu.dot_dimension_numbers<[1], [0], [0], [1], [0, 0, 1, 1], [], []>} : vector<512x144xf32>, vector<144x32xf32>, vector<512x32xf32> -> vector<512x32xf32>
    %c0_11 = arith.constant 0 : index
    %c0_12 = arith.constant 0 : index
    %34 = vector.load %arg4[%c0_11, %c0_12] : memref<1x32xf32, #tpu.memory_space<vmem>>, vector<1x32xf32>
    %35 = vector.broadcast %34 : vector<1x32xf32> to vector<512x32xf32>
    %36 = arith.addf %33, %35 : vector<512x32xf32>
    %cst_13 = arith.constant 0.000000e+00 : f32
    %37 = vector.broadcast %cst_13 : f32 to vector<512x32xf32>
    %38 = arith.maximumf %36, %37 : vector<512x32xf32>
    %39 = vector.extract_strided_slice %38 {offsets = [0, 0], sizes = [256, 32], strides = [1, 1]} : vector<512x32xf32> to vector<256x32xf32>
    %cst_14 = arith.constant dense<0.000000e+00> : vector<32xf32>
    %40 = vector.multi_reduction <add>, %39, %cst_14 [0] : vector<256x32xf32> to vector<32xf32>
    %41 = vector.shape_cast %40 : vector<32xf32> to vector<1x32xf32>
    %42 = vector.extract_strided_slice %38 {offsets = [256, 0], sizes = [256, 32], strides = [1, 1]} : vector<512x32xf32> to vector<256x32xf32>
    %cst_15 = arith.constant dense<0.000000e+00> : vector<32xf32>
    %43 = vector.multi_reduction <add>, %42, %cst_15 [0] : vector<256x32xf32> to vector<32xf32>
    %44 = vector.shape_cast %43 : vector<32xf32> to vector<1x32xf32>
    %45 = tpu.concatenate %41, %44 in 0 : vector<1x32xf32>, vector<1x32xf32> -> vector<2x32xf32>
    %cst_16 = arith.constant 3.906250e-03 : f32
    %46 = vector.broadcast %cst_16 : f32 to vector<2x32xf32>
    %47 = arith.mulf %45, %46 : vector<2x32xf32>
    %c0_17 = arith.constant 0 : index
    %c0_18 = arith.constant 0 : index
    %48 = vector.load %arg5[%c0_17, %c0_18] : memref<32x128xf32, #tpu.memory_space<vmem>>, vector<32x128xf32>
    %cst_19 = arith.constant dense<0.000000e+00> : vector<2x128xf32>
    %49 = tpu.matmul %47, %48, %cst_19 {dimension_numbers = #tpu.dot_dimension_numbers<[1], [0], [0], [1], [0, 0, 1, 1], [], []>} : vector<2x32xf32>, vector<32x128xf32>, vector<2x128xf32> -> vector<2x128xf32>
    %c0_20 = arith.constant 0 : index
    %c0_21 = arith.constant 0 : index
    %50 = vector.load %arg6[%c0_20, %c0_21] : memref<1x128xf32, #tpu.memory_space<vmem>>, vector<1x128xf32>
    %51 = vector.broadcast %50 : vector<1x128xf32> to vector<2x128xf32>
    %52 = arith.addf %49, %51 : vector<2x128xf32>
    %c0_22 = arith.constant 0 : index
    %c0_23 = arith.constant 0 : index
    %53 = vector.load %arg7[%c0_22, %c0_23] : memref<2x128xf32, #tpu.memory_space<vmem>>, vector<2x128xf32>
    tpu.vector_store %arg7[%c0_22, %c0_23], %52 {strides = array<i32>} : memref<2x128xf32, #tpu.memory_space<vmem>>, vector<2x128xf32>,
    return
  }
}

</mosaic_0001>

<llo_original>
// kernel: pretrained_forward.1
$region0: #{pretrained_forward.1}
  #allocation0 [shape = 'u32[]', space=smem, size = 0x4, offset = 0x4, fixed_abs, tag = 'smem constant byte address 0x4 - core index']
  #allocation1 [shape = 'u32[72,128]{1,0:T(1,128)}', space=vmem, size = 0x9000, scoped, tag = 'internal scratch']
  %s0 = inlined_call_operand.vmem [shape: f32[512,72], index: 0, kind: input, shape index: {}]
  %s1 = inlined_call_operand.vmem [shape: f32[72,16], index: 1, kind: input, shape index: {}]
  %s2 = inlined_call_operand.vmem [shape: f32[1,16], index: 2, kind: input, shape index: {}]
  %s3 = inlined_call_operand.vmem [shape: f32[144,32], index: 3, kind: input, shape index: {}]
  %s4 = inlined_call_operand.vmem [shape: f32[1,32], index: 4, kind: input, shape index: {}]
  %s5 = inlined_call_operand.vmem [shape: f32[32,128], index: 5, kind: input, shape index: {}]
  %s6 = inlined_call_operand.vmem [shape: f32[1,128], index: 6, kind: input, shape index: {}]
  %s7 = inlined_call_operand.hbm [shape: f32[2,128], index: 7, kind: output, shape index: {}]
  %s8 = sld [smem:[#allocation0]]
  $region38: #{pretrained_forward.1} parent=0
    _
  %s10 = ssub.s32 1, %s8
  %s11 = scalar_select 0, %s10, %s8
  $region1: #{pretrained_forward.1} parent=0
    #allocation2 [shape = 'u8[1024]{0}', space=vmem, size = 0x400, scoped, tag = 'output window, operand 0, single buffered']
    #allocation3 [shape = 's32[1]{0}', space=sflag, size = 0x4, scoped, tag = 'scoped memory for pretrained_forward.1']
    %12 = vsyncpa [#allocation3], 0
    // Predicated region
    $region2: #{pretrained_forward.1} parent=1 // pred_check
      _
    $region3: #{pretrained_forward.1} parent=1 // pred_check_branch
      %14 = sbr.rel (0) target = $region5
    $region4: #{pretrained_forward.1} parent=1 // pred_region
      _
    $region5: #{pretrained_forward.1} parent=1 // pred_fallthru
      _
    // Predicated region
    $region6: #{pretrained_forward.1} parent=1 // pred_check
      _
    $region7: #{pretrained_forward.1} parent=1 // pred_check_branch
      %16 = sbr.rel (0) target = $region9
    $region8: #{pretrained_forward.1} parent=1 // pred_region
      _
    $region9: #{pretrained_forward.1} parent=1 // pred_fallthru
      _
    // Predicated region
    $region10: #{pretrained_forward.1} parent=1 // pred_check
      _
    $region11: #{pretrained_forward.1} parent=1 // pred_check_branch
      %18 = sbr.rel (0) target = $region13
    $region12: #{pretrained_forward.1} parent=1 // pred_region
      _
    $region13: #{pretrained_forward.1} parent=1 // pred_fallthru
      _
    // Predicated region
    $region14: #{pretrained_forward.1} parent=1 // pred_check
      _
    $region15: #{pretrained_forward.1} parent=1 // pred_check_branch
      %20 = sbr.rel (0) target = $region17
    $region16: #{pretrained_forward.1} parent=1 // pred_region
      _
    $region17: #{pretrained_forward.1} parent=1 // pred_fallthru
      _
    // Predicated region
    $region18: #{pretrained_forward.1} parent=1 // pred_check
      _
    $region19: #{pretrained_forward.1} parent=1 // pred_check_branch
      %22 = sbr.rel (0) target = $region21
    $region20: #{pretrained_forward.1} parent=1 // pred_region
      _
    $region21: #{pretrained_forward.1} parent=1 // pred_fallthru
      _
    // Predicated region
    $region22: #{pretrained_forward.1} parent=1 // pred_check
      _
    $region23: #{pretrained_forward.1} parent=1 // pred_check_branch
      %24 = sbr.rel (0) target = $region25
    $region24: #{pretrained_forward.1} parent=1 // pred_region
      _
    $region25: #{pretrained_forward.1} parent=1 // pred_fallthru
      _
    // Predicated region
    $region26: #{pretrained_forward.1} parent=1 // pred_check
      _
    $region27: #{pretrained_forward.1} parent=1 // pred_check_branch
      %26 = sbr.rel (0) target = $region29
    $region28: #{pretrained_forward.1} parent=1 // pred_region
      _
    $region29: #{pretrained_forward.1} parent=1 // pred_fallthru
      _
    %v27 = vld [vmem:[%s0] sm:$0xff]
    %v28 = vld [vmem:[%s0 + $0x8] sm:$0xff]
    %v29 = vld [vmem:[%s0 + $0x10] sm:$0xff]
    %v30 = vld [vmem:[%s0 + $0x18] sm:$0xff]
    %v31 = vld [vmem:[%s0 + $0x20] sm:$0xff]
    %v32 = vld [vmem:[%s0 + $0x28] sm:$0xff]
    %v33 = vld [vmem:[%s0 + $0x30] sm:$0xff]
    %v34 = vld [vmem:[%s0 + $0x38] sm:$0xff]
    %v35 = vld [vmem:[%s0 + $0x40] sm:$0xff]
    %v36 = vld [vmem:[%s0 + $0x48] sm:$0xff]
    %v37 = vld [vmem:[%s0 + $0x50] sm:$0xff]
    %v38 = vld [vmem:[%s0 + $0x58] sm:$0xff]
    %v39 = vld [vmem:[%s0 + $0x60] sm:$0xff]
    %v40 = vld [vmem:[%s0 + $0x68] sm:$0xff]
    %v41 = vld [vmem:[%s0 + $0x70] sm:$0xff]
    %v42 = vld [vmem:[%s0 + $0x78] sm:$0xff]
    %v43 = vld [vmem:[%s0 + $0x80] sm:$0xff]
    %v44 = vld [vmem:[%s0 + $0x88] sm:$0xff]
    %v45 = vld [vmem:[%s0 + $0x90] sm:$0xff]
    %v46 = vld [vmem:[%s0 + $0x98] sm:$0xff]
    %v47 = vld [vmem:[%s0 + $0xa0] sm:$0xff]
    %v48 = vld [vmem:[%s0 + $0xa8] sm:$0xff]
    %v49 = vld [vmem:[%s0 + $0xb0] sm:$0xff]
    %v50 = vld [vmem:[%s0 + $0xb8] sm:$0xff]
    %v51 = vld [vmem:[%s0 + $0xc0] sm:$0xff]
    %v52 = vld [vmem:[%s0 + $0xc8] sm:$0xff]
    %v53 = vld [vmem:[%s0 + $0xd0] sm:$0xff]
    %v54 = vld [vmem:[%s0 + $0xd8] sm:$0xff]
    %v55 = vld [vmem:[%s0 + $0xe0] sm:$0xff]
    %v56 = vld [vmem:[%s0 + $0xe8] sm:$0xff]
    %v57 = vld [vmem:[%s0 + $0xf0] sm:$0xff]
    %v58 = vld [vmem:[%s0 + $0xf8] sm:$0xff]
    %v59 = vld [vmem:[%s0 + $0x100] sm:$0xff]
    %v60 = vld [vmem:[%s0 + $0x108] sm:$0xff]
    %v61 = vld [vmem:[%s0 + $0x110] sm:$0xff]
    %v62 = vld [vmem:[%s0 + $0x118] sm:$0xff]
    %v63 = vld [vmem:[%s0 + $0x120] sm:$0xff]
    %v64 = vld [vmem:[%s0 + $0x128] sm:$0xff]
    %v65 = vld [vmem:[%s0 + $0x130] sm:$0xff]
    %v66 = vld [vmem:[%s0 + $0x138] sm:$0xff]
    %v67 = vld [vmem:[%s0 + $0x140] sm:$0xff]
    %v68 = vld [vmem:[%s0 + $0x148] sm:$0xff]
    %v69 = vld [vmem:[%s0 + $0x150] sm:$0xff]
    %v70 = vld [vmem:[%s0 + $0x158] sm:$0xff]
    %v71 = vld [vmem:[%s0 + $0x160] sm:$0xff]
    %v72 = vld [vmem:[%s0 + $0x168] sm:$0xff]
    %v73 = vld [vmem:[%s0 + $0x170] sm:$0xff]
    %v74 = vld [vmem:[%s0 + $0x178] sm:$0xff]
    %v75 = vld [vmem:[%s0 + $0x180] sm:$0xff]
    %v76 = vld [vmem:[%s0 + $0x188] sm:$0xff]
    %v77 = vld [vmem:[%s0 + $0x190] sm:$0xff]
    %v78 = vld [vmem:[%s0 + $0x198] sm:$0xff]
    %v79 = vld [vmem:[%s0 + $0x1a0] sm:$0xff]
    %v80 = vld [vmem:[%s0 + $0x1a8] sm:$0xff]
    %v81 = vld [vmem:[%s0 + $0x1b0] sm:$0xff]
    %v82 = vld [vmem:[%s0 + $0x1b8] sm:$0xff]
    %v83 = vld [vmem:[%s0 + $0x1c0] sm:$0xff]
    %v84 = vld [vmem:[%s0 + $0x1c8] sm:$0xff]
    %v85 = vld [vmem:[%s0 + $0x1d0] sm:$0xff]
    %v86 = vld [vmem:[%s0 + $0x1d8] sm:$0xff]
    %v87 = vld [vmem:[%s0 + $0x1e0] sm:$0xff]
    %v88 = vld [vmem:[%s0 + $0x1e8] sm:$0xff]
    %v89 = vld [vmem:[%s0 + $0x1f0] sm:$0xff]
    %v90 = vld [vmem:[%s0 + $0x1f8] sm:$0xff]
    %v91 = vld [vmem:[%s1] sm:$0xff]
    %v92 = vld [vmem:[%s1 + $0x8] sm:$0xff]
    %v93 = vld [vmem:[%s1 + $0x10] sm:$0xff]
    %v94 = vld [vmem:[%s1 + $0x18] sm:$0xff]
    %v95 = vld [vmem:[%s1 + $0x20] sm:$0xff]
    %v96 = vld [vmem:[%s1 + $0x28] sm:$0xff]
    %v97 = vld [vmem:[%s1 + $0x30] sm:$0xff]
    %v98 = vld [vmem:[%s1 + $0x38] sm:$0xff]
    %v99 = vld [vmem:[%s1 + $0x40] sm:$0xff]
    %v100 = vld [vmem:[%s2] sm:$0x1]
    %v102 = vperm.slane %v100, 0
    %vm104 = vcmask 588800
    %v106 = vsel %vm104, %v27, 0
    %v109 = vsel %vm104, %v28, 0
    %v112 = vsel %vm104, %v29, 0
    %v115 = vsel %vm104, %v30, 0
    %v118 = vsel %vm104, %v31, 0
    %v121 = vsel %vm104, %v32, 0
    %v124 = vsel %vm104, %v33, 0
    %v127 = vsel %vm104, %v34, 0
    %v130 = vsel %vm104, %v35, 0
    %v133 = vsel %vm104, %v36, 0
    %v136 = vsel %vm104, %v37, 0
    %v139 = vsel %vm104, %v38, 0
    %v142 = vsel %vm104, %v39, 0
    %v145 = vsel %vm104, %v40, 0
    %v148 = vsel %vm104, %v41, 0
    %v151 = vsel %vm104, %v42, 0
    %v154 = vsel %vm104, %v43, 0
    %v157 = vsel %vm104, %v44, 0
    %v160 = vsel %vm104, %v45, 0
    %v163 = vsel %vm104, %v46, 0
    %v166 = vsel %vm104, %v47, 0
    %v169 = vsel %vm104, %v48, 0
    %v172 = vsel %vm104, %v49, 0
    %v175 = vsel %vm104, %v50, 0
    %v178 = vsel %vm104, %v51, 0
    %v181 = vsel %vm104, %v52, 0
    %v184 = vsel %vm104, %v53, 0
    %v187 = vsel %vm104, %v54, 0
    %v190 = vsel %vm104, %v55, 0
    %v193 = vsel %vm104, %v56, 0
    %v196 = vsel %vm104, %v57, 0
    %v199 = vsel %vm104, %v58, 0
    %v202 = vsel %vm104, %v59, 0
    %v205 = vsel %vm104, %v60, 0
    %v208 = vsel %vm104, %v61, 0
    %v211 = vsel %vm104, %v62, 0
    %v214 = vsel %vm104, %v63, 0
    %v217 = vsel %vm104, %v64, 0
    %v220 = vsel %vm104, %v65, 0
    %v223 = vsel %vm104, %v66, 0
    %v226 = vsel %vm104, %v67, 0
    %v229 = vsel %vm104, %v68, 0
    %v232 = vsel %vm104, %v69, 0
    %v235 = vsel %vm104, %v70, 0
    %v238 = vsel %vm104, %v71, 0
    %v241 = vsel %vm104, %v72, 0
    %v244 = vsel %vm104, %v73, 0
    %v247 = vsel %vm104, %v74, 0
    %v250 = vsel %vm104, %v75, 0
    %v253 = vsel %vm104, %v76, 0
    %v256 = vsel %vm104, %v77, 0
    %v259 = vsel %vm104, %v78, 0
    %v262 = vsel %vm104, %v79, 0
    %v265 = vsel %vm104, %v80, 0
    %v268 = vsel %vm104, %v81, 0
    %v271 = vsel %vm104, %v82, 0
    %v274 = vsel %vm104, %v83, 0
    %v277 = vsel %vm104, %v84, 0
    %v280 = vsel %vm104, %v85, 0
    %v283 = vsel %vm104, %v86, 0
    %v286 = vsel %vm104, %v87, 0
    %v289 = vsel %vm104, %v88, 0
    %v292 = vsel %vm104, %v89, 0
    %v295 = vsel %vm104, %v90, 0
    %297 = vmatpush.msra.mxu0 0.0
    %298 = vmatpush.msra.mxu0 0.0
    %299 = vmatpush.msra.mxu0 0.0
    %300 = vmatpush.msra.mxu0 0.0
    %301 = vmatpush.msra.mxu0 0.0
    %302 = vmatpush.msra.mxu0 0.0
    %303 = vmatpush.msra.mxu0 0.0
    %304 = vmatpush.msra.mxu0 %v99
    %305 = vmatpush.msra.mxu0 %v98
    %306 = vmatpush.msra.mxu0 %v97
    %307 = vmatpush.msra.mxu0 %v96
    %308 = vmatpush.msra.mxu0 %v95
    %309 = vmatpush.msra.mxu0 %v94
    %310 = vmatpush.msra.mxu0 %v93
    %311 = vmatpush.msra.mxu0 %v92
    %312 = vmatpush.msra.mxu0 %v91
    %313 = vmatmul.f32.gmra.mxu0 %v106
    %v314 = vpop.f32.mrf.mxu0
    %v315 = vadd.f32 %v102, %v314
    %316 = vmatmul.f32.gmra.mxu0 %v109
    %v317 = vpop.f32.mrf.mxu0
    %v318 = vadd.f32 %v102, %v317
    %319 = vmatmul.f32.gmra.mxu0 %v112
    %v320 = vpop.f32.mrf.mxu0
    %v321 = vadd.f32 %v102, %v320
    %322 = vmatmul.f32.gmra.mxu0 %v115
    %v323 = vpop.f32.mrf.mxu0
    %v324 = vadd.f32 %v102, %v323
    %325 = vmatmul.f32.gmra.mxu0 %v118
    %v326 = vpop.f32.mrf.mxu0
    %v327 = vadd.f32 %v102, %v326
    %328 = vmatmul.f32.gmra.mxu0 %v121
    %v329 = vpop.f32.mrf.mxu0
    %v330 = vadd.f32 %v102, %v329
    %331 = vmatmul.f32.gmra.mxu0 %v124
    %v332 = vpop.f32.mrf.mxu0
    %v333 = vadd.f32 %v102, %v332
    %334 = vmatmul.f32.gmra.mxu0 %v127
    %v335 = vpop.f32.mrf.mxu0
    %v336 = vadd.f32 %v102, %v335
    %337 = vmatmul.f32.gmra.mxu0 %v130
    %v338 = vpop.f32.mrf.mxu0
    %v339 = vadd.f32 %v102, %v338
    %340 = vmatmul.f32.gmra.mxu0 %v133
    %v341 = vpop.f32.mrf.mxu0
    %v342 = vadd.f32 %v102, %v341
    %343 = vmatmul.f32.gmra.mxu0 %v136
    %v344 = vpop.f32.mrf.mxu0
    %v345 = vadd.f32 %v102, %v344
    %346 = vmatmul.f32.gmra.mxu0 %v139
    %v347 = vpop.f32.mrf.mxu0
    %v348 = vadd.f32 %v102, %v347
    %349 = vmatmul.f32.gmra.mxu0 %v142
    %v350 = vpop.f32.mrf.mxu0
    %v351 = vadd.f32 %v102, %v350
    %352 = vmatmul.f32.gmra.mxu0 %v145
    %v353 = vpop.f32.mrf.mxu0
    %v354 = vadd.f32 %v102, %v353
    %355 = vmatmul.f32.gmra.mxu0 %v148
    %v356 = vpop.f32.mrf.mxu0
    %v357 = vadd.f32 %v102, %v356
    %358 = vmatmul.f32.gmra.mxu0 %v151
    %v359 = vpop.f32.mrf.mxu0
    %v360 = vadd.f32 %v102, %v359
    %361 = vmatmul.f32.gmra.mxu0 %v154
    %v362 = vpop.f32.mrf.mxu0
    %v363 = vadd.f32 %v102, %v362
    %364 = vmatmul.f32.gmra.mxu0 %v157
    %v365 = vpop.f32.mrf.mxu0
    %v366 = vadd.f32 %v102, %v365
    %367 = vmatmul.f32.gmra.mxu0 %v160
    %v368 = vpop.f32.mrf.mxu0
    %v369 = vadd.f32 %v102, %v368
    %370 = vmatmul.f32.gmra.mxu0 %v163
    %v371 = vpop.f32.mrf.mxu0
    %v372 = vadd.f32 %v102, %v371
    %373 = vmatmul.f32.gmra.mxu0 %v166
    %v374 = vpop.f32.mrf.mxu0
    %v375 = vadd.f32 %v102, %v374
    %376 = vmatmul.f32.gmra.mxu0 %v169
    %v377 = vpop.f32.mrf.mxu0
    %v378 = vadd.f32 %v102, %v377
    %379 = vmatmul.f32.gmra.mxu0 %v172
    %v380 = vpop.f32.mrf.mxu0
    %v381 = vadd.f32 %v102, %v380
    %382 = vmatmul.f32.gmra.mxu0 %v175
    %v383 = vpop.f32.mrf.mxu0
    %v384 = vadd.f32 %v102, %v383
    %385 = vmatmul.f32.gmra.mxu0 %v178
    %v386 = vpop.f32.mrf.mxu0
    %v387 = vadd.f32 %v102, %v386
    %388 = vmatmul.f32.gmra.mxu0 %v181
    %v389 = vpop.f32.mrf.mxu0
    %v390 = vadd.f32 %v102, %v389
    %391 = vmatmul.f32.gmra.mxu0 %v184
    %v392 = vpop.f32.mrf.mxu0
    %v393 = vadd.f32 %v102, %v392
    %394 = vmatmul.f32.gmra.mxu0 %v187
    %v395 = vpop.f32.mrf.mxu0
    %v396 = vadd.f32 %v102, %v395
    %397 = vmatmul.f32.gmra.mxu0 %v190
    %v398 = vpop.f32.mrf.mxu0
    %v399 = vadd.f32 %v102, %v398
    %400 = vmatmul.f32.gmra.mxu0 %v193
    %v401 = vpop.f32.mrf.mxu0
    %v402 = vadd.f32 %v102, %v401
    %403 = vmatmul.f32.gmra.mxu0 %v196
    %v404 = vpop.f32.mrf.mxu0
    %v405 = vadd.f32 %v102, %v404
    %406 = vmatmul.f32.gmra.mxu0 %v199
    %v407 = vpop.f32.mrf.mxu0
    %v408 = vadd.f32 %v102, %v407
    %409 = vmatmul.f32.gmra.mxu0 %v202
    %v410 = vpop.f32.mrf.mxu0
    %v411 = vadd.f32 %v102, %v410
    %412 = vmatmul.f32.gmra.mxu0 %v205
    %v413 = vpop.f32.mrf.mxu0
    %v414 = vadd.f32 %v102, %v413
    %415 = vmatmul.f32.gmra.mxu0 %v208
    %v416 = vpop.f32.mrf.mxu0
    %v417 = vadd.f32 %v102, %v416
    %418 = vmatmul.f32.gmra.mxu0 %v211
    %v419 = vpop.f32.mrf.mxu0
    %v420 = vadd.f32 %v102, %v419
    %421 = vmatmul.f32.gmra.mxu0 %v214
    %v422 = vpop.f32.mrf.mxu0
    %v423 = vadd.f32 %v102, %v422
    %424 = vmatmul.f32.gmra.mxu0 %v217
    %v425 = vpop.f32.mrf.mxu0
    %v426 = vadd.f32 %v102, %v425
    %427 = vmatmul.f32.gmra.mxu0 %v220
    %v428 = vpop.f32.mrf.mxu0
    %v429 = vadd.f32 %v102, %v428
    %430 = vmatmul.f32.gmra.mxu0 %v223
    %v431 = vpop.f32.mrf.mxu0
    %v432 = vadd.f32 %v102, %v431
    %433 = vmatmul.f32.gmra.mxu0 %v226
    %v434 = vpop.f32.mrf.mxu0
    %v435 = vadd.f32 %v102, %v434
    %436 = vmatmul.f32.gmra.mxu0 %v229
    %v437 = vpop.f32.mrf.mxu0
    %v438 = vadd.f32 %v102, %v437
    %439 = vmatmul.f32.gmra.mxu0 %v232
    %v440 = vpop.f32.mrf.mxu0
    %v441 = vadd.f32 %v102, %v440
    %442 = vmatmul.f32.gmra.mxu0 %v235
    %v443 = vpop.f32.mrf.mxu0
    %v444 = vadd.f32 %v102, %v443
    %445 = vmatmul.f32.gmra.mxu0 %v238
    %v446 = vpop.f32.mrf.mxu0
    %v447 = vadd.f32 %v102, %v446
    %448 = vmatmul.f32.gmra.mxu0 %v241
    %v449 = vpop.f32.mrf.mxu0
    %v450 = vadd.f32 %v102, %v449
    %451 = vmatmul.f32.gmra.mxu0 %v244
    %v452 = vpop.f32.mrf.mxu0
    %v453 = vadd.f32 %v102, %v452
    %454 = vmatmul.f32.gmra.mxu0 %v247
    %v455 = vpop.f32.mrf.mxu0
    %v456 = vadd.f32 %v102, %v455
    %457 = vmatmul.f32.gmra.mxu0 %v250
    %v458 = vpop.f32.mrf.mxu0
    %v459 = vadd.f32 %v102, %v458
    %460 = vmatmul.f32.gmra.mxu0 %v253
    %v461 = vpop.f32.mrf.mxu0
    %v462 = vadd.f32 %v102, %v461
    %463 = vmatmul.f32.gmra.mxu0 %v256
    %v464 = vpop.f32.mrf.mxu0
    %v465 = vadd.f32 %v102, %v464
    %466 = vmatmul.f32.gmra.mxu0 %v259
    %v467 = vpop.f32.mrf.mxu0
    %v468 = vadd.f32 %v102, %v467
    %469 = vmatmul.f32.gmra.mxu0 %v262
    %v470 = vpop.f32.mrf.mxu0
    %v471 = vadd.f32 %v102, %v470
    %472 = vmatmul.f32.gmra.mxu0 %v265
    %v473 = vpop.f32.mrf.mxu0
    %v474 = vadd.f32 %v102, %v473
    %475 = vmatmul.f32.gmra.mxu0 %v268
    %v476 = vpop.f32.mrf.mxu0
    %v477 = vadd.f32 %v102, %v476
    %478 = vmatmul.f32.gmra.mxu0 %v271
    %v479 = vpop.f32.mrf.mxu0
    %v480 = vadd.f32 %v102, %v479
    %481 = vmatmul.f32.gmra.mxu0 %v274
    %v482 = vpop.f32.mrf.mxu0
    %v483 = vadd.f32 %v102, %v482
    %484 = vmatmul.f32.gmra.mxu0 %v277
    %v485 = vpop.f32.mrf.mxu0
    %v486 = vadd.f32 %v102, %v485
    %487 = vmatmul.f32.gmra.mxu0 %v280
    %v488 = vpop.f32.mrf.mxu0
    %v489 = vadd.f32 %v102, %v488
    %490 = vmatmul.f32.gmra.mxu0 %v283
    %v491 = vpop.f32.mrf.mxu0
    %v492 = vadd.f32 %v102, %v491
    %493 = vmatmul.f32.gmra.mxu0 %v286
    %v494 = vpop.f32.mrf.mxu0
    %v495 = vadd.f32 %v102, %v494
    %496 = vmatmul.f32.gmra.mxu0 %v289
    %v497 = vpop.f32.mrf.mxu0
    %v498 = vadd.f32 %v102, %v497
    %499 = vmatmul.f32.gmra.mxu0 %v292
    %v500 = vpop.f32.mrf.mxu0
    %v501 = vadd.f32 %v102, %v500
    %502 = vmatmul.f32.gmra.mxu0 %v295
    %v503 = vpop.f32.mrf.mxu0
    %v504 = vadd.f32 %v102, %v503
    %505 = vdwg.mxu0
    %v506 = vmax.f32 %v315, 0.0
    %v507 = vmax.f32 %v318, 0.0
    %v508 = vmax.f32 %v321, 0.0
    %v509 = vmax.f32 %v324, 0.0
    %v510 = vmax.f32 %v327, 0.0
    %v511 = vmax.f32 %v330, 0.0
    %v512 = vmax.f32 %v333, 0.0
    %v513 = vmax.f32 %v336, 0.0
    %v514 = vmax.f32 %v339, 0.0
    %v515 = vmax.f32 %v342, 0.0
    %v516 = vmax.f32 %v345, 0.0
    %v517 = vmax.f32 %v348, 0.0
    %v518 = vmax.f32 %v351, 0.0
    %v519 = vmax.f32 %v354, 0.0
    %v520 = vmax.f32 %v357, 0.0
    %v521 = vmax.f32 %v360, 0.0
    %v522 = vmax.f32 %v363, 0.0
    %v523 = vmax.f32 %v366, 0.0
    %v524 = vmax.f32 %v369, 0.0
    %v525 = vmax.f32 %v372, 0.0
    %v526 = vmax.f32 %v375, 0.0
    %v527 = vmax.f32 %v378, 0.0
    %v528 = vmax.f32 %v381, 0.0
    %v529 = vmax.f32 %v384, 0.0
    %v530 = vmax.f32 %v387, 0.0
    %v531 = vmax.f32 %v390, 0.0
    %v532 = vmax.f32 %v393, 0.0
    %v533 = vmax.f32 %v396, 0.0
    %v534 = vmax.f32 %v399, 0.0
    %v535 = vmax.f32 %v402, 0.0
    %v536 = vmax.f32 %v405, 0.0
    %v537 = vmax.f32 %v408, 0.0
    %v538 = vmax.f32 %v411, 0.0
    %v539 = vmax.f32 %v414, 0.0
    %v540 = vmax.f32 %v417, 0.0
    %v541 = vmax.f32 %v420, 0.0
    %v542 = vmax.f32 %v423, 0.0
    %v543 = vmax.f32 %v426, 0.0
    %v544 = vmax.f32 %v429, 0.0
    %v545 = vmax.f32 %v432, 0.0
    %v546 = vmax.f32 %v435, 0.0
    %v547 = vmax.f32 %v438, 0.0
    %v548 = vmax.f32 %v441, 0.0
    %v549 = vmax.f32 %v444, 0.0
    %v550 = vmax.f32 %v447, 0.0
    %v551 = vmax.f32 %v450, 0.0
    %v552 = vmax.f32 %v453, 0.0
    %v553 = vmax.f32 %v456, 0.0
    %v554 = vmax.f32 %v459, 0.0
    %v555 = vmax.f32 %v462, 0.0
    %v556 = vmax.f32 %v465, 0.0
    %v557 = vmax.f32 %v468, 0.0
    %v558 = vmax.f32 %v471, 0.0
    %v559 = vmax.f32 %v474, 0.0
    %v560 = vmax.f32 %v477, 0.0
    %v561 = vmax.f32 %v480, 0.0
    %v562 = vmax.f32 %v483, 0.0
    %v563 = vmax.f32 %v486, 0.0
    %v564 = vmax.f32 %v489, 0.0
    %v565 = vmax.f32 %v492, 0.0
    %v566 = vmax.f32 %v495, 0.0
    %v567 = vmax.f32 %v498, 0.0
    %v568 = vmax.f32 %v501, 0.0
    %v569 = vmax.f32 %v504, 0.0
    %vm635 = vcmask 1040384
    %v636 = vrot.slane 0.0, 7
    %v637 = vsel %vm635, %v636, %v636
    %v638 = vrot.slane %v506, 7
    %v639 = vrot.slane %v507, 7
    %v640 = vsel %vm635, %v638, %v639
    %v641 = vrot.slane %v508, 7
    %v642 = vrot.slane %v509, 7
    %v643 = vsel %vm635, %v641, %v642
    %v644 = vrot.slane %v510, 7
    %v645 = vrot.slane %v511, 7
    %v646 = vsel %vm635, %v644, %v645
    %v647 = vrot.slane %v512, 7
    %v648 = vrot.slane %v513, 7
    %v649 = vsel %vm635, %v647, %v648
    %v650 = vrot.slane %v514, 7
    %v651 = vrot.slane %v515, 7
    %v652 = vsel %vm635, %v650, %v651
    %v653 = vrot.slane %v516, 7
    %v654 = vrot.slane %v517, 7
    %v655 = vsel %vm635, %v653, %v654
    %v656 = vrot.slane %v518, 7
    %v657 = vrot.slane %v519, 7
    %v658 = vsel %vm635, %v656, %v657
    %v659 = vrot.slane %v520, 7
    %v660 = vrot.slane %v521, 7
    %v661 = vsel %vm635, %v659, %v660
    %v662 = vrot.slane %v522, 7
    %v663 = vrot.slane %v523, 7
    %v664 = vsel %vm635, %v662, %v663
    %v665 = vrot.slane %v524, 7
    %v666 = vrot.slane %v525, 7
    %v667 = vsel %vm635, %v665, %v666
    %v668 = vrot.slane %v526, 7
    %v669 = vrot.slane %v527, 7
    %v670 = vsel %vm635, %v668, %v669
    %v671 = vrot.slane %v528, 7
    %v672 = vrot.slane %v529, 7
    %v673 = vsel %vm635, %v671, %v672
    %v674 = vrot.slane %v530, 7
    %v675 = vrot.slane %v531, 7
    %v676 = vsel %vm635, %v674, %v675
    %v677 = vrot.slane %v532, 7
    %v678 = vrot.slane %v533, 7
    %v679 = vsel %vm635, %v677, %v678
    %v680 = vrot.slane %v534, 7
    %v681 = vrot.slane %v535, 7
    %v682 = vsel %vm635, %v680, %v681
    %v683 = vrot.slane %v536, 7
    %v684 = vrot.slane %v537, 7
    %v685 = vsel %vm635, %v683, %v684
    %v686 = vrot.slane %v538, 7
    %v687 = vrot.slane %v539, 7
    %v688 = vsel %vm635, %v686, %v687
    %v689 = vrot.slane %v540, 7
    %v690 = vrot.slane %v541, 7
    %v691 = vsel %vm635, %v689, %v690
    %v692 = vrot.slane %v542, 7
    %v693 = vrot.slane %v543, 7
    %v694 = vsel %vm635, %v692, %v693
    %v695 = vrot.slane %v544, 7
    %v696 = vrot.slane %v545, 7
    %v697 = vsel %vm635, %v695, %v696
    %v698 = vrot.slane %v546, 7
    %v699 = vrot.slane %v547, 7
    %v700 = vsel %vm635, %v698, %v699
    %v701 = vrot.slane %v548, 7
    %v702 = vrot.slane %v549, 7
    %v703 = vsel %vm635, %v701, %v702
    %v704 = vrot.slane %v550, 7
    %v705 = vrot.slane %v551, 7
    %v706 = vsel %vm635, %v704, %v705
    %v707 = vrot.slane %v552, 7
    %v708 = vrot.slane %v553, 7
    %v709 = vsel %vm635, %v707, %v708
    %v710 = vrot.slane %v554, 7
    %v711 = vrot.slane %v555, 7
    %v712 = vsel %vm635, %v710, %v711
    %v713 = vrot.slane %v556, 7
    %v714 = vrot.slane %v557, 7
    %v715 = vsel %vm635, %v713, %v714
    %v716 = vrot.slane %v558, 7
    %v717 = vrot.slane %v559, 7
    %v718 = vsel %vm635, %v716, %v717
    %v719 = vrot.slane %v560, 7
    %v720 = vrot.slane %v561, 7
    %v721 = vsel %vm635, %v719, %v720
    %v722 = vrot.slane %v562, 7
    %v723 = vrot.slane %v563, 7
    %v724 = vsel %vm635, %v722, %v723
    %v725 = vrot.slane %v564, 7
    %v726 = vrot.slane %v565, 7
    %v727 = vsel %vm635, %v725, %v726
    %v728 = vrot.slane %v566, 7
    %v729 = vrot.slane %v567, 7
    %v730 = vsel %vm635, %v728, %v729
    %v731 = vrot.slane %v568, 7
    %v732 = vrot.slane %v569, 7
    %v733 = vsel %vm635, %v731, %v732
    %v830 = vsel %vm635, 0.0, %v636
    %v831 = vsel %vm635, 0.0, %v638
    %v832 = vsel %vm635, 0.0, %v641
    %v833 = vsel %vm635, 0.0, %v644
    %v834 = vsel %vm635, 0.0, %v647
    %v835 = vsel %vm635, 0.0, %v650
    %v836 = vsel %vm635, 0.0, %v653
    %v837 = vsel %vm635, 0.0, %v656
    %v838 = vsel %vm635, 0.0, %v659
    %v839 = vsel %vm635, 0.0, %v662
    %v840 = vsel %vm635, 0.0, %v665
    %v841 = vsel %vm635, 0.0, %v668
    %v842 = vsel %vm635, 0.0, %v671
    %v843 = vsel %vm635, 0.0, %v674
    %v844 = vsel %vm635, 0.0, %v677
    %v845 = vsel %vm635, 0.0, %v680
    %v846 = vsel %vm635, 0.0, %v683
    %v847 = vsel %vm635, 0.0, %v686
    %v848 = vsel %vm635, 0.0, %v689
    %v849 = vsel %vm635, 0.0, %v692
    %v850 = vsel %vm635, 0.0, %v695
    %v851 = vsel %vm635, 0.0, %v698
    %v852 = vsel %vm635, 0.0, %v701
    %v853 = vsel %vm635, 0.0, %v704
    %v854 = vsel %vm635, 0.0, %v707
    %v855 = vsel %vm635, 0.0, %v710
    %v856 = vsel %vm635, 0.0, %v713
    %v857 = vsel %vm635, 0.0, %v716
    %v858 = vsel %vm635, 0.0, %v719
    %v859 = vsel %vm635, 0.0, %v722
    %v860 = vsel %vm635, 0.0, %v725
    %v861 = vsel %vm635, 0.0, %v728
    %v862 = vsel %vm635, 0.0, %v731
    %v863 = vsel %vm635, %v636, 0.0
    %v864 = vsel %vm635, %v639, 0.0
    %v865 = vsel %vm635, %v642, 0.0
    %v866 = vsel %vm635, %v645, 0.0
    %v867 = vsel %vm635, %v648, 0.0
    %v868 = vsel %vm635, %v651, 0.0
    %v869 = vsel %vm635, %v654, 0.0
    %v870 = vsel %vm635, %v657, 0.0
    %v871 = vsel %vm635, %v660, 0.0
    %v872 = vsel %vm635, %v663, 0.0
    %v873 = vsel %vm635, %v666, 0.0
    %v874 = vsel %vm635, %v669, 0.0
    %v875 = vsel %vm635, %v672, 0.0
    %v876 = vsel %vm635, %v675, 0.0
    %v877 = vsel %vm635, %v678, 0.0
    %v878 = vsel %vm635, %v681, 0.0
    %v879 = vsel %vm635, %v684, 0.0
    %v880 = vsel %vm635, %v687, 0.0
    %v881 = vsel %vm635, %v690, 0.0
    %v882 = vsel %vm635, %v693, 0.0
    %v883 = vsel %vm635, %v696, 0.0
    %v884 = vsel %vm635, %v699, 0.0
    %v885 = vsel %vm635, %v702, 0.0
    %v886 = vsel %vm635, %v705, 0.0
    %v887 = vsel %vm635, %v708, 0.0
    %v888 = vsel %vm635, %v711, 0.0
    %v889 = vsel %vm635, %v714, 0.0
    %v890 = vsel %vm635, %v717, 0.0
    %v891 = vsel %vm635, %v720, 0.0
    %v892 = vsel %vm635, %v723, 0.0
    %v893 = vsel %vm635, %v726, 0.0
    %v894 = vsel %vm635, %v729, 0.0
    %v895 = vsel %vm635, %v732, 0.0
    %vm958 = vcmask 1046528
    %v959 = vrot.slane %v830, 1
    %v960 = vrot.slane %v637, 1
    %v961 = vsel %vm958, %v959, %v960
    %v962 = vrot.slane %v863, 1
    %v963 = vsel %vm958, %v960, %v962
    %v964 = vrot.slane %v831, 1
    %v965 = vrot.slane %v640, 1
    %v966 = vsel %vm958, %v964, %v965
    %v967 = vrot.slane %v864, 1
    %v968 = vsel %vm958, %v965, %v967
    %v969 = vrot.slane %v832, 1
    %v970 = vrot.slane %v643, 1
    %v971 = vsel %vm958, %v969, %v970
    %v972 = vrot.slane %v865, 1
    %v973 = vsel %vm958, %v970, %v972
    %v974 = vrot.slane %v833, 1
    %v975 = vrot.slane %v646, 1
    %v976 = vsel %vm958, %v974, %v975
    %v977 = vrot.slane %v866, 1
    %v978 = vsel %vm958, %v975, %v977
    %v979 = vrot.slane %v834, 1
    %v980 = vrot.slane %v649, 1
    %v981 = vsel %vm958, %v979, %v980
    %v982 = vrot.slane %v867, 1
    %v983 = vsel %vm958, %v980, %v982
    %v984 = vrot.slane %v835, 1
    %v985 = vrot.slane %v652, 1
    %v986 = vsel %vm958, %v984, %v985
    %v987 = vrot.slane %v868, 1
    %v988 = vsel %vm958, %v985, %v987
    %v989 = vrot.slane %v836, 1
    %v990 = vrot.slane %v655, 1
    %v991 = vsel %vm958, %v989, %v990
    %v992 = vrot.slane %v869, 1
    %v993 = vsel %vm958, %v990, %v992
    %v994 = vrot.slane %v837, 1
    %v995 = vrot.slane %v658, 1
    %v996 = vsel %vm958, %v994, %v995
    %v997 = vrot.slane %v870, 1
    %v998 = vsel %vm958, %v995, %v997
    %v999 = vrot.slane %v838, 1
    %v1000 = vrot.slane %v661, 1
    %v1001 = vsel %vm958, %v999, %v1000
    %v1002 = vrot.slane %v871, 1
    %v1003 = vsel %vm958, %v1000, %v1002
    %v1004 = vrot.slane %v839, 1
    %v1005 = vrot.slane %v664, 1
    %v1006 = vsel %vm958, %v1004, %v1005
    %v1007 = vrot.slane %v872, 1
    %v1008 = vsel %vm958, %v1005, %v1007
    %v1009 = vrot.slane %v840, 1
    %v1010 = vrot.slane %v667, 1
    %v1011 = vsel %vm958, %v1009, %v1010
    %v1012 = vrot.slane %v873, 1
    %v1013 = vsel %vm958, %v1010, %v1012
    %v1014 = vrot.slane %v841, 1
    %v1015 = vrot.slane %v670, 1
    %v1016 = vsel %vm958, %v1014, %v1015
    %v1017 = vrot.slane %v874, 1
    %v1018 = vsel %vm958, %v1015, %v1017
    %v1019 = vrot.slane %v842, 1
    %v1020 = vrot.slane %v673, 1
    %v1021 = vsel %vm958, %v1019, %v1020
    %v1022 = vrot.slane %v875, 1
    %v1023 = vsel %vm958, %v1020, %v1022
    %v1024 = vrot.slane %v843, 1
    %v1025 = vrot.slane %v676, 1
    %v1026 = vsel %vm958, %v1024, %v1025
    %v1027 = vrot.slane %v876, 1
    %v1028 = vsel %vm958, %v1025, %v1027
    %v1029 = vrot.slane %v844, 1
    %v1030 = vrot.slane %v679, 1
    %v1031 = vsel %vm958, %v1029, %v1030
    %v1032 = vrot.slane %v877, 1
    %v1033 = vsel %vm958, %v1030, %v1032
    %v1034 = vrot.slane %v845, 1
    %v1035 = vrot.slane %v682, 1
    %v1036 = vsel %vm958, %v1034, %v1035
    %v1037 = vrot.slane %v878, 1
    %v1038 = vsel %vm958, %v1035, %v1037
    %v1039 = vrot.slane %v847, 1
    %v1040 = vrot.slane %v688, 1
    %v1041 = vsel %vm958, %v1039, %v1040
    %v1042 = vrot.slane %v880, 1
    %v1043 = vsel %vm958, %v1040, %v1042
    %v1044 = vrot.slane %v848, 1
    %v1045 = vrot.slane %v691, 1
    %v1046 = vsel %vm958, %v1044, %v1045
    %v1047 = vrot.slane %v881, 1
    %v1048 = vsel %vm958, %v1045, %v1047
    %v1049 = vrot.slane %v849, 1
    %v1050 = vrot.slane %v694, 1
    %v1051 = vsel %vm958, %v1049, %v1050
    %v1052 = vrot.slane %v882, 1
    %v1053 = vsel %vm958, %v1050, %v1052
    %v1054 = vrot.slane %v850, 1
    %v1055 = vrot.slane %v697, 1
    %v1056 = vsel %vm958, %v1054, %v1055
    %v1057 = vrot.slane %v883, 1
    %v1058 = vsel %vm958, %v1055, %v1057
    %v1059 = vrot.slane %v851, 1
    %v1060 = vrot.slane %v700, 1
    %v1061 = vsel %vm958, %v1059, %v1060
    %v1062 = vrot.slane %v884, 1
    %v1063 = vsel %vm958, %v1060, %v1062
    %v1064 = vrot.slane %v852, 1
    %v1065 = vrot.slane %v703, 1
    %v1066 = vsel %vm958, %v1064, %v1065
    %v1067 = vrot.slane %v885, 1
    %v1068 = vsel %vm958, %v1065, %v1067
    %v1069 = vrot.slane %v853, 1
    %v1070 = vrot.slane %v706, 1
    %v1071 = vsel %vm958, %v1069, %v1070
    %v1072 = vrot.slane %v886, 1
    %v1073 = vsel %vm958, %v1070, %v1072
    %v1074 = vrot.slane %v854, 1
    %v1075 = vrot.slane %v709, 1
    %v1076 = vsel %vm958, %v1074, %v1075
    %v1077 = vrot.slane %v887, 1
    %v1078 = vsel %vm958, %v1075, %v1077
    %v1079 = vrot.slane %v855, 1
    %v1080 = vrot.slane %v712, 1
    %v1081 = vsel %vm958, %v1079, %v1080
    %v1082 = vrot.slane %v888, 1
    %v1083 = vsel %vm958, %v1080, %v1082
    %v1084 = vrot.slane %v856, 1
    %v1085 = vrot.slane %v715, 1
    %v1086 = vsel %vm958, %v1084, %v1085
    %v1087 = vrot.slane %v889, 1
    %v1088 = vsel %vm958, %v1085, %v1087
    %v1089 = vrot.slane %v857, 1
    %v1090 = vrot.slane %v718, 1
    %v1091 = vsel %vm958, %v1089, %v1090
    %v1092 = vrot.slane %v890, 1
    %v1093 = vsel %vm958, %v1090, %v1092
    %v1094 = vrot.slane %v858, 1
    %v1095 = vrot.slane %v721, 1
    %v1096 = vsel %vm958, %v1094, %v1095
    %v1097 = vrot.slane %v891, 1
    %v1098 = vsel %vm958, %v1095, %v1097
    %v1099 = vrot.slane %v859, 1
    %v1100 = vrot.slane %v724, 1
    %v1101 = vsel %vm958, %v1099, %v1100
    %v1102 = vrot.slane %v892, 1
    %v1103 = vsel %vm958, %v1100, %v1102
    %v1104 = vrot.slane %v860, 1
    %v1105 = vrot.slane %v727, 1
    %v1106 = vsel %vm958, %v1104, %v1105
    %v1107 = vrot.slane %v893, 1
    %v1108 = vsel %vm958, %v1105, %v1107
    %v1109 = vrot.slane %v861, 1
    %v1110 = vrot.slane %v730, 1
    %v1111 = vsel %vm958, %v1109, %v1110
    %v1112 = vrot.slane %v894, 1
    %v1113 = vsel %vm958, %v1110, %v1112
    %vm1114 = vcmask 1045504
    %v1115 = vrot.slane %v830, 2
    %v1116 = vrot.slane %v637, 2
    %v1117 = vsel %vm1114, %v1115, %v1116
    %v1118 = vrot.slane %v863, 2
    %v1119 = vsel %vm1114, %v1116, %v1118
    %v1120 = vrot.slane %v831, 2
    %v1121 = vrot.slane %v640, 2
    %v1122 = vsel %vm1114, %v1120, %v1121
    %v1123 = vrot.slane %v864, 2
    %v1124 = vsel %vm1114, %v1121, %v1123
    %v1125 = vrot.slane %v832, 2
    %v1126 = vrot.slane %v643, 2
    %v1127 = vsel %vm1114, %v1125, %v1126
    %v1128 = vrot.slane %v865, 2
    %v1129 = vsel %vm1114, %v1126, %v1128
    %v1130 = vrot.slane %v833, 2
    %v1131 = vrot.slane %v646, 2
    %v1132 = vsel %vm1114, %v1130, %v1131
    %v1133 = vrot.slane %v866, 2
    %v1134 = vsel %vm1114, %v1131, %v1133
    %v1135 = vrot.slane %v834, 2
    %v1136 = vrot.slane %v649, 2
    %v1137 = vsel %vm1114, %v1135, %v1136
    %v1138 = vrot.slane %v867, 2
    %v1139 = vsel %vm1114, %v1136, %v1138
    %v1140 = vrot.slane %v835, 2
    %v1141 = vrot.slane %v652, 2
    %v1142 = vsel %vm1114, %v1140, %v1141
    %v1143 = vrot.slane %v868, 2
    %v1144 = vsel %vm1114, %v1141, %v1143
    %v1145 = vrot.slane %v836, 2
    %v1146 = vrot.slane %v655, 2
    %v1147 = vsel %vm1114, %v1145, %v1146
    %v1148 = vrot.slane %v869, 2
    %v1149 = vsel %vm1114, %v1146, %v1148
    %v1150 = vrot.slane %v837, 2
    %v1151 = vrot.slane %v658, 2
    %v1152 = vsel %vm1114, %v1150, %v1151
    %v1153 = vrot.slane %v870, 2
    %v1154 = vsel %vm1114, %v1151, %v1153
    %v1155 = vrot.slane %v838, 2
    %v1156 = vrot.slane %v661, 2
    %v1157 = vsel %vm1114, %v1155, %v1156
    %v1158 = vrot.slane %v871, 2
    %v1159 = vsel %vm1114, %v1156, %v1158
    %v1160 = vrot.slane %v839, 2
    %v1161 = vrot.slane %v664, 2
    %v1162 = vsel %vm1114, %v1160, %v1161
    %v1163 = vrot.slane %v872, 2
    %v1164 = vsel %vm1114, %v1161, %v1163
    %v1165 = vrot.slane %v840, 2
    %v1166 = vrot.slane %v667, 2
    %v1167 = vsel %vm1114, %v1165, %v1166
    %v1168 = vrot.slane %v873, 2
    %v1169 = vsel %vm1114, %v1166, %v1168
    %v1170 = vrot.slane %v841, 2
    %v1171 = vrot.slane %v670, 2
    %v1172 = vsel %vm1114, %v1170, %v1171
    %v1173 = vrot.slane %v874, 2
    %v1174 = vsel %vm1114, %v1171, %v1173
    %v1175 = vrot.slane %v842, 2
    %v1176 = vrot.slane %v673, 2
    %v1177 = vsel %vm1114, %v1175, %v1176
    %v1178 = vrot.slane %v875, 2
    %v1179 = vsel %vm1114, %v1176, %v1178
    %v1180 = vrot.slane %v843, 2
    %v1181 = vrot.slane %v676, 2
    %v1182 = vsel %vm1114, %v1180, %v1181
    %v1183 = vrot.slane %v876, 2
    %v1184 = vsel %vm1114, %v1181, %v1183
    %v1185 = vrot.slane %v844, 2
    %v1186 = vrot.slane %v679, 2
    %v1187 = vsel %vm1114, %v1185, %v1186
    %v1188 = vrot.slane %v877, 2
    %v1189 = vsel %vm1114, %v1186, %v1188
    %v1190 = vrot.slane %v845, 2
    %v1191 = vrot.slane %v682, 2
    %v1192 = vsel %vm1114, %v1190, %v1191
    %v1193 = vrot.slane %v878, 2
    %v1194 = vsel %vm1114, %v1191, %v1193
    %v1195 = vrot.slane %v847, 2
    %v1196 = vrot.slane %v688, 2
    %v1197 = vsel %vm1114, %v1195, %v1196
    %v1198 = vrot.slane %v880, 2
    %v1199 = vsel %vm1114, %v1196, %v1198
    %v1200 = vrot.slane %v848, 2
    %v1201 = vrot.slane %v691, 2
    %v1202 = vsel %vm1114, %v1200, %v1201
    %v1203 = vrot.slane %v881, 2
    %v1204 = vsel %vm1114, %v1201, %v1203
    %v1205 = vrot.slane %v849, 2
    %v1206 = vrot.slane %v694, 2
    %v1207 = vsel %vm1114, %v1205, %v1206
    %v1208 = vrot.slane %v882, 2
    %v1209 = vsel %vm1114, %v1206, %v1208
    %v1210 = vrot.slane %v850, 2
    %v1211 = vrot.slane %v697, 2
    %v1212 = vsel %vm1114, %v1210, %v1211
    %v1213 = vrot.slane %v883, 2
    %v1214 = vsel %vm1114, %v1211, %v1213
    %v1215 = vrot.slane %v851, 2
    %v1216 = vrot.slane %v700, 2
    %v1217 = vsel %vm1114, %v1215, %v1216
    %v1218 = vrot.slane %v884, 2
    %v1219 = vsel %vm1114, %v1216, %v1218
    %v1220 = vrot.slane %v852, 2
    %v1221 = vrot.slane %v703, 2
    %v1222 = vsel %vm1114, %v1220, %v1221
    %v1223 = vrot.slane %v885, 2
    %v1224 = vsel %vm1114, %v1221, %v1223
    %v1225 = vrot.slane %v853, 2
    %v1226 = vrot.slane %v706, 2
    %v1227 = vsel %vm1114, %v1225, %v1226
    %v1228 = vrot.slane %v886, 2
    %v1229 = vsel %vm1114, %v1226, %v1228
    %v1230 = vrot.slane %v854, 2
    %v1231 = vrot.slane %v709, 2
    %v1232 = vsel %vm1114, %v1230, %v1231
    %v1233 = vrot.slane %v887, 2
    %v1234 = vsel %vm1114, %v1231, %v1233
    %v1235 = vrot.slane %v855, 2
    %v1236 = vrot.slane %v712, 2
    %v1237 = vsel %vm1114, %v1235, %v1236
    %v1238 = vrot.slane %v888, 2
    %v1239 = vsel %vm1114, %v1236, %v1238
    %v1240 = vrot.slane %v856, 2
    %v1241 = vrot.slane %v715, 2
    %v1242 = vsel %vm1114, %v1240, %v1241
    %v1243 = vrot.slane %v889, 2
    %v1244 = vsel %vm1114, %v1241, %v1243
    %v1245 = vrot.slane %v857, 2
    %v1246 = vrot.slane %v718, 2
    %v1247 = vsel %vm1114, %v1245, %v1246
    %v1248 = vrot.slane %v890, 2
    %v1249 = vsel %vm1114, %v1246, %v1248
    %v1250 = vrot.slane %v858, 2
    %v1251 = vrot.slane %v721, 2
    %v1252 = vsel %vm1114, %v1250, %v1251
    %v1253 = vrot.slane %v891, 2
    %v1254 = vsel %vm1114, %v1251, %v1253
    %v1255 = vrot.slane %v859, 2
    %v1256 = vrot.slane %v724, 2
    %v1257 = vsel %vm1114, %v1255, %v1256
    %v1258 = vrot.slane %v892, 2
    %v1259 = vsel %vm1114, %v1256, %v1258
    %v1260 = vrot.slane %v860, 2
    %v1261 = vrot.slane %v727, 2
    %v1262 = vsel %vm1114, %v1260, %v1261
    %v1263 = vrot.slane %v893, 2
    %v1264 = vsel %vm1114, %v1261, %v1263
    %v1265 = vrot.slane %v861, 2
    %v1266 = vrot.slane %v730, 2
    %v1267 = vsel %vm1114, %v1265, %v1266
    %v1268 = vrot.slane %v894, 2
    %v1269 = vsel %vm1114, %v1266, %v1268
    %v1274 = vrot.slane %v846, 1
    %v1275 = vrot.slane %v685, 1
    %v1276 = vsel %vm958, %v1274, %v1275
    %v1277 = vrot.slane %v879, 1
    %v1278 = vsel %vm958, %v1275, %v1277
    %v1279 = vrot.slane %v862, 1
    %v1280 = vrot.slane %v733, 1
    %v1281 = vsel %vm958, %v1279, %v1280
    %v1282 = vrot.slane %v895, 1
    %v1283 = vsel %vm958, %v1280, %v1282
    %v1284 = vrot.slane %v846, 2
    %v1285 = vrot.slane %v685, 2
    %v1286 = vsel %vm1114, %v1284, %v1285
    %v1287 = vrot.slane %v879, 2
    %v1288 = vsel %vm1114, %v1285, %v1287
    %v1289 = vrot.slane %v862, 2
    %v1290 = vrot.slane %v733, 2
    %v1291 = vsel %vm1114, %v1289, %v1290
    %v1292 = vrot.slane %v895, 2
    %v1293 = vsel %vm1114, %v1290, %v1292
    %1294 = vrot.lane.b32.xlu0 %v961, 16
    %v1295 = vpop.permute.xlu0 %1294
    %1296 = vrot.lane.b32.xlu0 %v963, 16
    %v1297 = vpop.permute.xlu0 %1296
    %1298 = vrot.lane.b32.xlu0 %v966, 16
    %v1299 = vpop.permute.xlu0 %1298
    %1300 = vrot.lane.b32.xlu0 %v968, 16
    %v1301 = vpop.permute.xlu0 %1300
    %1302 = vrot.lane.b32.xlu0 %v971, 16
    %v1303 = vpop.permute.xlu0 %1302
    %1304 = vrot.lane.b32.xlu0 %v973, 16
    %v1305 = vpop.permute.xlu0 %1304
    %1306 = vrot.lane.b32.xlu0 %v976, 16
    %v1307 = vpop.permute.xlu0 %1306
    %1308 = vrot.lane.b32.xlu0 %v978, 16
    %v1309 = vpop.permute.xlu0 %1308
    %1310 = vrot.lane.b32.xlu0 %v981, 16
    %v1311 = vpop.permute.xlu0 %1310
    %1312 = vrot.lane.b32.xlu0 %v983, 16
    %v1313 = vpop.permute.xlu0 %1312
    %1314 = vrot.lane.b32.xlu0 %v986, 16
    %v1315 = vpop.permute.xlu0 %1314
    %1316 = vrot.lane.b32.xlu0 %v988, 16
    %v1317 = vpop.permute.xlu0 %1316
    %1318 = vrot.lane.b32.xlu0 %v991, 16
    %v1319 = vpop.permute.xlu0 %1318
    %1320 = vrot.lane.b32.xlu0 %v993, 16
    %v1321 = vpop.permute.xlu0 %1320
    %1322 = vrot.lane.b32.xlu0 %v996, 16
    %v1323 = vpop.permute.xlu0 %1322
    %1324 = vrot.lane.b32.xlu0 %v998, 16
    %v1325 = vpop.permute.xlu0 %1324
    %1326 = vrot.lane.b32.xlu0 %v1001, 16
    %v1327 = vpop.permute.xlu0 %1326
    %1328 = vrot.lane.b32.xlu0 %v1003, 16
    %v1329 = vpop.permute.xlu0 %1328
    %1330 = vrot.lane.b32.xlu0 %v1006, 16
    %v1331 = vpop.permute.xlu0 %1330
    %1332 = vrot.lane.b32.xlu0 %v1008, 16
    %v1333 = vpop.permute.xlu0 %1332
    %1334 = vrot.lane.b32.xlu0 %v1011, 16
    %v1335 = vpop.permute.xlu0 %1334
    %1336 = vrot.lane.b32.xlu0 %v1013, 16
    %v1337 = vpop.permute.xlu0 %1336
    %1338 = vrot.lane.b32.xlu0 %v1016, 16
    %v1339 = vpop.permute.xlu0 %1338
    %1340 = vrot.lane.b32.xlu0 %v1018, 16
    %v1341 = vpop.permute.xlu0 %1340
    %1342 = vrot.lane.b32.xlu0 %v1021, 16
    %v1343 = vpop.permute.xlu0 %1342
    %1344 = vrot.lane.b32.xlu0 %v1023, 16
    %v1345 = vpop.permute.xlu0 %1344
    %1346 = vrot.lane.b32.xlu0 %v1026, 16
    %v1347 = vpop.permute.xlu0 %1346
    %1348 = vrot.lane.b32.xlu0 %v1028, 16
    %v1349 = vpop.permute.xlu0 %1348
    %1350 = vrot.lane.b32.xlu0 %v1031, 16
    %v1351 = vpop.permute.xlu0 %1350
    %1352 = vrot.lane.b32.xlu0 %v1033, 16
    %v1353 = vpop.permute.xlu0 %1352
    %1354 = vrot.lane.b32.xlu0 %v1036, 16
    %v1355 = vpop.permute.xlu0 %1354
    %1356 = vrot.lane.b32.xlu0 %v1038, 16
    %v1357 = vpop.permute.xlu0 %1356
    %1358 = vrot.lane.b32.xlu0 %v1041, 16
    %v1359 = vpop.permute.xlu0 %1358
    %1360 = vrot.lane.b32.xlu0 %v1043, 16
    %v1361 = vpop.permute.xlu0 %1360
    %1362 = vrot.lane.b32.xlu0 %v1046, 16
    %v1363 = vpop.permute.xlu0 %1362
    %1364 = vrot.lane.b32.xlu0 %v1048, 16
    %v1365 = vpop.permute.xlu0 %1364
    %1366 = vrot.lane.b32.xlu0 %v1051, 16
    %v1367 = vpop.permute.xlu0 %1366
    %1368 = vrot.lane.b32.xlu0 %v1053, 16
    %v1369 = vpop.permute.xlu0 %1368
    %1370 = vrot.lane.b32.xlu0 %v1056, 16
    %v1371 = vpop.permute.xlu0 %1370
    %1372 = vrot.lane.b32.xlu0 %v1058, 16
    %v1373 = vpop.permute.xlu0 %1372
    %1374 = vrot.lane.b32.xlu0 %v1061, 16
    %v1375 = vpop.permute.xlu0 %1374
    %1376 = vrot.lane.b32.xlu0 %v1063, 16
    %v1377 = vpop.permute.xlu0 %1376
    %1378 = vrot.lane.b32.xlu0 %v1066, 16
    %v1379 = vpop.permute.xlu0 %1378
    %1380 = vrot.lane.b32.xlu0 %v1068, 16
    %v1381 = vpop.permute.xlu0 %1380
    %1382 = vrot.lane.b32.xlu0 %v1071, 16
    %v1383 = vpop.permute.xlu0 %1382
    %1384 = vrot.lane.b32.xlu0 %v1073, 16
    %v1385 = vpop.permute.xlu0 %1384
    %1386 = vrot.lane.b32.xlu0 %v1076, 16
    %v1387 = vpop.permute.xlu0 %1386
    %1388 = vrot.lane.b32.xlu0 %v1078, 16
    %v1389 = vpop.permute.xlu0 %1388
    %1390 = vrot.lane.b32.xlu0 %v1081, 16
    %v1391 = vpop.permute.xlu0 %1390
    %1392 = vrot.lane.b32.xlu0 %v1083, 16
    %v1393 = vpop.permute.xlu0 %1392
    %1394 = vrot.lane.b32.xlu0 %v1086, 16
    %v1395 = vpop.permute.xlu0 %1394
    %1396 = vrot.lane.b32.xlu0 %v1088, 16
    %v1397 = vpop.permute.xlu0 %1396
    %1398 = vrot.lane.b32.xlu0 %v1091, 16
    %v1399 = vpop.permute.xlu0 %1398
    %1400 = vrot.lane.b32.xlu0 %v1093, 16
    %v1401 = vpop.permute.xlu0 %1400
    %1402 = vrot.lane.b32.xlu0 %v1096, 16
    %v1403 = vpop.permute.xlu0 %1402
    %1404 = vrot.lane.b32.xlu0 %v1098, 16
    %v1405 = vpop.permute.xlu0 %1404
    %1406 = vrot.lane.b32.xlu0 %v1101, 16
    %v1407 = vpop.permute.xlu0 %1406
    %1408 = vrot.lane.b32.xlu0 %v1103, 16
    %v1409 = vpop.permute.xlu0 %1408
    %1410 = vrot.lane.b32.xlu0 %v1106, 16
    %v1411 = vpop.permute.xlu0 %1410
    %1412 = vrot.lane.b32.xlu0 %v1108, 16
    %v1413 = vpop.permute.xlu0 %1412
    %1414 = vrot.lane.b32.xlu0 %v1111, 16
    %v1415 = vpop.permute.xlu0 %1414
    %1416 = vrot.lane.b32.xlu0 %v1113, 16
    %v1417 = vpop.permute.xlu0 %1416
    %1480 = vrot.lane.b32.xlu0 %v1117, 32
    %v1481 = vpop.permute.xlu0 %1480
    %1482 = vrot.lane.b32.xlu0 %v1119, 32
    %v1483 = vpop.permute.xlu0 %1482
    %1484 = vrot.lane.b32.xlu0 %v1122, 32
    %v1485 = vpop.permute.xlu0 %1484
    %1486 = vrot.lane.b32.xlu0 %v1124, 32
    %v1487 = vpop.permute.xlu0 %1486
    %1488 = vrot.lane.b32.xlu0 %v1127, 32
    %v1489 = vpop.permute.xlu0 %1488
    %1490 = vrot.lane.b32.xlu0 %v1129, 32
    %v1491 = vpop.permute.xlu0 %1490
    %1492 = vrot.lane.b32.xlu0 %v1132, 32
    %v1493 = vpop.permute.xlu0 %1492
    %1494 = vrot.lane.b32.xlu0 %v1134, 32
    %v1495 = vpop.permute.xlu0 %1494
    %1496 = vrot.lane.b32.xlu0 %v1137, 32
    %v1497 = vpop.permute.xlu0 %1496
    %1498 = vrot.lane.b32.xlu0 %v1139, 32
    %v1499 = vpop.permute.xlu0 %1498
    %1500 = vrot.lane.b32.xlu0 %v1142, 32
    %v1501 = vpop.permute.xlu0 %1500
    %1502 = vrot.lane.b32.xlu0 %v1144, 32
    %v1503 = vpop.permute.xlu0 %1502
    %1504 = vrot.lane.b32.xlu0 %v1147, 32
    %v1505 = vpop.permute.xlu0 %1504
    %1506 = vrot.lane.b32.xlu0 %v1149, 32
    %v1507 = vpop.permute.xlu0 %1506
    %1508 = vrot.lane.b32.xlu0 %v1152, 32
    %v1509 = vpop.permute.xlu0 %1508
    %1510 = vrot.lane.b32.xlu0 %v1154, 32
    %v1511 = vpop.permute.xlu0 %1510
    %1512 = vrot.lane.b32.xlu0 %v1157, 32
    %v1513 = vpop.permute.xlu0 %1512
    %1514 = vrot.lane.b32.xlu0 %v1159, 32
    %v1515 = vpop.permute.xlu0 %1514
    %1516 = vrot.lane.b32.xlu0 %v1162, 32
    %v1517 = vpop.permute.xlu0 %1516
    %1518 = vrot.lane.b32.xlu0 %v1164, 32
    %v1519 = vpop.permute.xlu0 %1518
    %1520 = vrot.lane.b32.xlu0 %v1167, 32
    %v1521 = vpop.permute.xlu0 %1520
    %1522 = vrot.lane.b32.xlu0 %v1169, 32
    %v1523 = vpop.permute.xlu0 %1522
    %1524 = vrot.lane.b32.xlu0 %v1172, 32
    %v1525 = vpop.permute.xlu0 %1524
    %1526 = vrot.lane.b32.xlu0 %v1174, 32
    %v1527 = vpop.permute.xlu0 %1526
    %1528 = vrot.lane.b32.xlu0 %v1177, 32
    %v1529 = vpop.permute.xlu0 %1528
    %1530 = vrot.lane.b32.xlu0 %v1179, 32
    %v1531 = vpop.permute.xlu0 %1530
    %1532 = vrot.lane.b32.xlu0 %v1182, 32
    %v1533 = vpop.permute.xlu0 %1532
    %1534 = vrot.lane.b32.xlu0 %v1184, 32
    %v1535 = vpop.permute.xlu0 %1534
    %1536 = vrot.lane.b32.xlu0 %v1187, 32
    %v1537 = vpop.permute.xlu0 %1536
    %1538 = vrot.lane.b32.xlu0 %v1189, 32
    %v1539 = vpop.permute.xlu0 %1538
    %1540 = vrot.lane.b32.xlu0 %v1192, 32
    %v1541 = vpop.permute.xlu0 %1540
    %1542 = vrot.lane.b32.xlu0 %v1194, 32
    %v1543 = vpop.permute.xlu0 %1542
    %1544 = vrot.lane.b32.xlu0 %v1197, 32
    %v1545 = vpop.permute.xlu0 %1544
    %1546 = vrot.lane.b32.xlu0 %v1199, 32
    %v1547 = vpop.permute.xlu0 %1546
    %1548 = vrot.lane.b32.xlu0 %v1202, 32
    %v1549 = vpop.permute.xlu0 %1548
    %1550 = vrot.lane.b32.xlu0 %v1204, 32
    %v1551 = vpop.permute.xlu0 %1550
    %1552 = vrot.lane.b32.xlu0 %v1207, 32
    %v1553 = vpop.permute.xlu0 %1552
    %1554 = vrot.lane.b32.xlu0 %v1209, 32
    %v1555 = vpop.permute.xlu0 %1554
    %1556 = vrot.lane.b32.xlu0 %v1212, 32
    %v1557 = vpop.permute.xlu0 %1556
    %1558 = vrot.lane.b32.xlu0 %v1214, 32
    %v1559 = vpop.permute.xlu0 %1558
    %1560 = vrot.lane.b32.xlu0 %v1217, 32
    %v1561 = vpop.permute.xlu0 %1560
    %1562 = vrot.lane.b32.xlu0 %v1219, 32
    %v1563 = vpop.permute.xlu0 %1562
    %1564 = vrot.lane.b32.xlu0 %v1222, 32
    %v1565 = vpop.permute.xlu0 %1564
    %1566 = vrot.lane.b32.xlu0 %v1224, 32
    %v1567 = vpop.permute.xlu0 %1566
    %1568 = vrot.lane.b32.xlu0 %v1227, 32
    %v1569 = vpop.permute.xlu0 %1568
    %1570 = vrot.lane.b32.xlu0 %v1229, 32
    %v1571 = vpop.permute.xlu0 %1570
    %1572 = vrot.lane.b32.xlu0 %v1232, 32
    %v1573 = vpop.permute.xlu0 %1572
    %1574 = vrot.lane.b32.xlu0 %v1234, 32
    %v1575 = vpop.permute.xlu0 %1574
    %1576 = vrot.lane.b32.xlu0 %v1237, 32
    %v1577 = vpop.permute.xlu0 %1576
    %1578 = vrot.lane.b32.xlu0 %v1239, 32
    %v1579 = vpop.permute.xlu0 %1578
    %1580 = vrot.lane.b32.xlu0 %v1242, 32
    %v1581 = vpop.permute.xlu0 %1580
    %1582 = vrot.lane.b32.xlu0 %v1244, 32
    %v1583 = vpop.permute.xlu0 %1582
    %1584 = vrot.lane.b32.xlu0 %v1247, 32
    %v1585 = vpop.permute.xlu0 %1584
    %1586 = vrot.lane.b32.xlu0 %v1249, 32
    %v1587 = vpop.permute.xlu0 %1586
    %1588 = vrot.lane.b32.xlu0 %v1252, 32
    %v1589 = vpop.permute.xlu0 %1588
    %1590 = vrot.lane.b32.xlu0 %v1254, 32
    %v1591 = vpop.permute.xlu0 %1590
    %1592 = vrot.lane.b32.xlu0 %v1257, 32
    %v1593 = vpop.permute.xlu0 %1592
    %1594 = vrot.lane.b32.xlu0 %v1259, 32
    %v1595 = vpop.permute.xlu0 %1594
    %1596 = vrot.lane.b32.xlu0 %v1262, 32
    %v1597 = vpop.permute.xlu0 %1596
    %1598 = vrot.lane.b32.xlu0 %v1264, 32
    %v1599 = vpop.permute.xlu0 %1598
    %1600 = vrot.lane.b32.xlu0 %v1267, 32
    %v1601 = vpop.permute.xlu0 %1600
    %1602 = vrot.lane.b32.xlu0 %v1269, 32
    %v1603 = vpop.permute.xlu0 %1602
    %1666 = vrot.lane.b32.xlu0 %v831, 48
    %v1667 = vpop.permute.xlu0 %1666
    %1668 = vrot.lane.b32.xlu0 %v640, 48
    %v1669 = vpop.permute.xlu0 %1668
    %1670 = vrot.lane.b32.xlu0 %v832, 48
    %v1671 = vpop.permute.xlu0 %1670
    %1672 = vrot.lane.b32.xlu0 %v643, 48
    %v1673 = vpop.permute.xlu0 %1672
    %1674 = vrot.lane.b32.xlu0 %v833, 48
    %v1675 = vpop.permute.xlu0 %1674
    %1676 = vrot.lane.b32.xlu0 %v646, 48
    %v1677 = vpop.permute.xlu0 %1676
    %1678 = vrot.lane.b32.xlu0 %v834, 48
    %v1679 = vpop.permute.xlu0 %1678
    %1680 = vrot.lane.b32.xlu0 %v649, 48
    %v1681 = vpop.permute.xlu0 %1680
    %1682 = vrot.lane.b32.xlu0 %v835, 48
    %v1683 = vpop.permute.xlu0 %1682
    %1684 = vrot.lane.b32.xlu0 %v652, 48
    %v1685 = vpop.permute.xlu0 %1684
    %1686 = vrot.lane.b32.xlu0 %v836, 48
    %v1687 = vpop.permute.xlu0 %1686
    %1688 = vrot.lane.b32.xlu0 %v655, 48
    %v1689 = vpop.permute.xlu0 %1688
    %1690 = vrot.lane.b32.xlu0 %v837, 48
    %v1691 = vpop.permute.xlu0 %1690
    %1692 = vrot.lane.b32.xlu0 %v658, 48
    %v1693 = vpop.permute.xlu0 %1692
    %1694 = vrot.lane.b32.xlu0 %v838, 48
    %v1695 = vpop.permute.xlu0 %1694
    %1696 = vrot.lane.b32.xlu0 %v661, 48
    %v1697 = vpop.permute.xlu0 %1696
    %1698 = vrot.lane.b32.xlu0 %v839, 48
    %v1699 = vpop.permute.xlu0 %1698
    %1700 = vrot.lane.b32.xlu0 %v664, 48
    %v1701 = vpop.permute.xlu0 %1700
    %1702 = vrot.lane.b32.xlu0 %v840, 48
    %v1703 = vpop.permute.xlu0 %1702
    %1704 = vrot.lane.b32.xlu0 %v667, 48
    %v1705 = vpop.permute.xlu0 %1704
    %1706 = vrot.lane.b32.xlu0 %v841, 48
    %v1707 = vpop.permute.xlu0 %1706
    %1708 = vrot.lane.b32.xlu0 %v670, 48
    %v1709 = vpop.permute.xlu0 %1708
    %1710 = vrot.lane.b32.xlu0 %v842, 48
    %v1711 = vpop.permute.xlu0 %1710
    %1712 = vrot.lane.b32.xlu0 %v673, 48
    %v1713 = vpop.permute.xlu0 %1712
    %1714 = vrot.lane.b32.xlu0 %v843, 48
    %v1715 = vpop.permute.xlu0 %1714
    %1716 = vrot.lane.b32.xlu0 %v676, 48
    %v1717 = vpop.permute.xlu0 %1716
    %1718 = vrot.lane.b32.xlu0 %v844, 48
    %v1719 = vpop.permute.xlu0 %1718
    %1720 = vrot.lane.b32.xlu0 %v679, 48
    %v1721 = vpop.permute.xlu0 %1720
    %1722 = vrot.lane.b32.xlu0 %v845, 48
    %v1723 = vpop.permute.xlu0 %1722
    %1724 = vrot.lane.b32.xlu0 %v682, 48
    %v1725 = vpop.permute.xlu0 %1724
    %1726 = vrot.lane.b32.xlu0 %v846, 48
    %v1727 = vpop.permute.xlu0 %1726
    %1728 = vrot.lane.b32.xlu0 %v685, 48
    %v1729 = vpop.permute.xlu0 %1728
    %1730 = vrot.lane.b32.xlu0 %v847, 48
    %v1731 = vpop.permute.xlu0 %1730
    %1732 = vrot.lane.b32.xlu0 %v688, 48
    %v1733 = vpop.permute.xlu0 %1732
    %1734 = vrot.lane.b32.xlu0 %v848, 48
    %v1735 = vpop.permute.xlu0 %1734
    %1736 = vrot.lane.b32.xlu0 %v691, 48
    %v1737 = vpop.permute.xlu0 %1736
    %1738 = vrot.lane.b32.xlu0 %v849, 48
    %v1739 = vpop.permute.xlu0 %1738
    %1740 = vrot.lane.b32.xlu0 %v694, 48
    %v1741 = vpop.permute.xlu0 %1740
    %1742 = vrot.lane.b32.xlu0 %v850, 48
    %v1743 = vpop.permute.xlu0 %1742
    %1744 = vrot.lane.b32.xlu0 %v697, 48
    %v1745 = vpop.permute.xlu0 %1744
    %1746 = vrot.lane.b32.xlu0 %v851, 48
    %v1747 = vpop.permute.xlu0 %1746
    %1748 = vrot.lane.b32.xlu0 %v700, 48
    %v1749 = vpop.permute.xlu0 %1748
    %1750 = vrot.lane.b32.xlu0 %v852, 48
    %v1751 = vpop.permute.xlu0 %1750
    %1752 = vrot.lane.b32.xlu0 %v703, 48
    %v1753 = vpop.permute.xlu0 %1752
    %1754 = vrot.lane.b32.xlu0 %v853, 48
    %v1755 = vpop.permute.xlu0 %1754
    %1756 = vrot.lane.b32.xlu0 %v706, 48
    %v1757 = vpop.permute.xlu0 %1756
    %1758 = vrot.lane.b32.xlu0 %v854, 48
    %v1759 = vpop.permute.xlu0 %1758
    %1760 = vrot.lane.b32.xlu0 %v709, 48
    %v1761 = vpop.permute.xlu0 %1760
    %1762 = vrot.lane.b32.xlu0 %v855, 48
    %v1763 = vpop.permute.xlu0 %1762
    %1764 = vrot.lane.b32.xlu0 %v712, 48
    %v1765 = vpop.permute.xlu0 %1764
    %1766 = vrot.lane.b32.xlu0 %v856, 48
    %v1767 = vpop.permute.xlu0 %1766
    %1768 = vrot.lane.b32.xlu0 %v715, 48
    %v1769 = vpop.permute.xlu0 %1768
    %1770 = vrot.lane.b32.xlu0 %v857, 48
    %v1771 = vpop.permute.xlu0 %1770
    %1772 = vrot.lane.b32.xlu0 %v718, 48
    %v1773 = vpop.permute.xlu0 %1772
    %1774 = vrot.lane.b32.xlu0 %v858, 48
    %v1775 = vpop.permute.xlu0 %1774
    %1776 = vrot.lane.b32.xlu0 %v721, 48
    %v1777 = vpop.permute.xlu0 %1776
    %1778 = vrot.lane.b32.xlu0 %v859, 48
    %v1779 = vpop.permute.xlu0 %1778
    %1780 = vrot.lane.b32.xlu0 %v724, 48
    %v1781 = vpop.permute.xlu0 %1780
    %1782 = vrot.lane.b32.xlu0 %v860, 48
    %v1783 = vpop.permute.xlu0 %1782
    %1784 = vrot.lane.b32.xlu0 %v727, 48
    %v1785 = vpop.permute.xlu0 %1784
    %1786 = vrot.lane.b32.xlu0 %v861, 48
    %v1787 = vpop.permute.xlu0 %1786
    %1788 = vrot.lane.b32.xlu0 %v730, 48
    %v1789 = vpop.permute.xlu0 %1788
    %1790 = vrot.lane.b32.xlu0 %v862, 48
    %v1791 = vpop.permute.xlu0 %1790
    %1792 = vrot.lane.b32.xlu0 %v733, 48
    %v1793 = vpop.permute.xlu0 %1792
    %1858 = vrot.lane.b32.xlu0 %v966, 64
    %v1859 = vpop.permute.xlu0 %1858
    %1860 = vrot.lane.b32.xlu0 %v968, 64
    %v1861 = vpop.permute.xlu0 %1860
    %1862 = vrot.lane.b32.xlu0 %v971, 64
    %v1863 = vpop.permute.xlu0 %1862
    %1864 = vrot.lane.b32.xlu0 %v973, 64
    %v1865 = vpop.permute.xlu0 %1864
    %1866 = vrot.lane.b32.xlu0 %v976, 64
    %v1867 = vpop.permute.xlu0 %1866
    %1868 = vrot.lane.b32.xlu0 %v978, 64
    %v1869 = vpop.permute.xlu0 %1868
    %1870 = vrot.lane.b32.xlu0 %v981, 64
    %v1871 = vpop.permute.xlu0 %1870
    %1872 = vrot.lane.b32.xlu0 %v983, 64
    %v1873 = vpop.permute.xlu0 %1872
    %1874 = vrot.lane.b32.xlu0 %v986, 64
    %v1875 = vpop.permute.xlu0 %1874
    %1876 = vrot.lane.b32.xlu0 %v988, 64
    %v1877 = vpop.permute.xlu0 %1876
    %1878 = vrot.lane.b32.xlu0 %v991, 64
    %v1879 = vpop.permute.xlu0 %1878
    %1880 = vrot.lane.b32.xlu0 %v993, 64
    %v1881 = vpop.permute.xlu0 %1880
    %1882 = vrot.lane.b32.xlu0 %v996, 64
    %v1883 = vpop.permute.xlu0 %1882
    %1884 = vrot.lane.b32.xlu0 %v998, 64
    %v1885 = vpop.permute.xlu0 %1884
    %1886 = vrot.lane.b32.xlu0 %v1001, 64
    %v1887 = vpop.permute.xlu0 %1886
    %1888 = vrot.lane.b32.xlu0 %v1003, 64
    %v1889 = vpop.permute.xlu0 %1888
    %1890 = vrot.lane.b32.xlu0 %v1006, 64
    %v1891 = vpop.permute.xlu0 %1890
    %1892 = vrot.lane.b32.xlu0 %v1008, 64
    %v1893 = vpop.permute.xlu0 %1892
    %1894 = vrot.lane.b32.xlu0 %v1011, 64
    %v1895 = vpop.permute.xlu0 %1894
    %1896 = vrot.lane.b32.xlu0 %v1013, 64
    %v1897 = vpop.permute.xlu0 %1896
    %1898 = vrot.lane.b32.xlu0 %v1016, 64
    %v1899 = vpop.permute.xlu0 %1898
    %1900 = vrot.lane.b32.xlu0 %v1018, 64
    %v1901 = vpop.permute.xlu0 %1900
    %1902 = vrot.lane.b32.xlu0 %v1021, 64
    %v1903 = vpop.permute.xlu0 %1902
    %1904 = vrot.lane.b32.xlu0 %v1023, 64
    %v1905 = vpop.permute.xlu0 %1904
    %1906 = vrot.lane.b32.xlu0 %v1026, 64
    %v1907 = vpop.permute.xlu0 %1906
    %1908 = vrot.lane.b32.xlu0 %v1028, 64
    %v1909 = vpop.permute.xlu0 %1908
    %1910 = vrot.lane.b32.xlu0 %v1031, 64
    %v1911 = vpop.permute.xlu0 %1910
    %1912 = vrot.lane.b32.xlu0 %v1033, 64
    %v1913 = vpop.permute.xlu0 %1912
    %1914 = vrot.lane.b32.xlu0 %v1036, 64
    %v1915 = vpop.permute.xlu0 %1914
    %1916 = vrot.lane.b32.xlu0 %v1038, 64
    %v1917 = vpop.permute.xlu0 %1916
    %1918 = vrot.lane.b32.xlu0 %v1276, 64
    %v1919 = vpop.permute.xlu0 %1918
    %1920 = vrot.lane.b32.xlu0 %v1278, 64
    %v1921 = vpop.permute.xlu0 %1920
    %1922 = vrot.lane.b32.xlu0 %v1041, 64
    %v1923 = vpop.permute.xlu0 %1922
    %1924 = vrot.lane.b32.xlu0 %v1043, 64
    %v1925 = vpop.permute.xlu0 %1924
    %1926 = vrot.lane.b32.xlu0 %v1046, 64
    %v1927 = vpop.permute.xlu0 %1926
    %1928 = vrot.lane.b32.xlu0 %v1048, 64
    %v1929 = vpop.permute.xlu0 %1928
    %1930 = vrot.lane.b32.xlu0 %v1051, 64
    %v1931 = vpop.permute.xlu0 %1930
    %1932 = vrot.lane.b32.xlu0 %v1053, 64
    %v1933 = vpop.permute.xlu0 %1932
    %1934 = vrot.lane.b32.xlu0 %v1056, 64
    %v1935 = vpop.permute.xlu0 %1934
    %1936 = vrot.lane.b32.xlu0 %v1058, 64
    %v1937 = vpop.permute.xlu0 %1936
    %1938 = vrot.lane.b32.xlu0 %v1061, 64
    %v1939 = vpop.permute.xlu0 %1938
    %1940 = vrot.lane.b32.xlu0 %v1063, 64
    %v1941 = vpop.permute.xlu0 %1940
    %1942 = vrot.lane.b32.xlu0 %v1066, 64
    %v1943 = vpop.permute.xlu0 %1942
    %1944 = vrot.lane.b32.xlu0 %v1068, 64
    %v1945 = vpop.permute.xlu0 %1944
    %1946 = vrot.lane.b32.xlu0 %v1071, 64
    %v1947 = vpop.permute.xlu0 %1946
    %1948 = vrot.lane.b32.xlu0 %v1073, 64
    %v1949 = vpop.permute.xlu0 %1948
    %1950 = vrot.lane.b32.xlu0 %v1076, 64
    %v1951 = vpop.permute.xlu0 %1950
    %1952 = vrot.lane.b32.xlu0 %v1078, 64
    %v1953 = vpop.permute.xlu0 %1952
    %1954 = vrot.lane.b32.xlu0 %v1081, 64
    %v1955 = vpop.permute.xlu0 %1954
    %1956 = vrot.lane.b32.xlu0 %v1083, 64
    %v1957 = vpop.permute.xlu0 %1956
    %1958 = vrot.lane.b32.xlu0 %v1086, 64
    %v1959 = vpop.permute.xlu0 %1958
    %1960 = vrot.lane.b32.xlu0 %v1088, 64
    %v1961 = vpop.permute.xlu0 %1960
    %1962 = vrot.lane.b32.xlu0 %v1091, 64
    %v1963 = vpop.permute.xlu0 %1962
    %1964 = vrot.lane.b32.xlu0 %v1093, 64
    %v1965 = vpop.permute.xlu0 %1964
    %1966 = vrot.lane.b32.xlu0 %v1096, 64
    %v1967 = vpop.permute.xlu0 %1966
    %1968 = vrot.lane.b32.xlu0 %v1098, 64
    %v1969 = vpop.permute.xlu0 %1968
    %1970 = vrot.lane.b32.xlu0 %v1101, 64
    %v1971 = vpop.permute.xlu0 %1970
    %1972 = vrot.lane.b32.xlu0 %v1103, 64
    %v1973 = vpop.permute.xlu0 %1972
    %1974 = vrot.lane.b32.xlu0 %v1106, 64
    %v1975 = vpop.permute.xlu0 %1974
    %1976 = vrot.lane.b32.xlu0 %v1108, 64
    %v1977 = vpop.permute.xlu0 %1976
    %1978 = vrot.lane.b32.xlu0 %v1111, 64
    %v1979 = vpop.permute.xlu0 %1978
    %1980 = vrot.lane.b32.xlu0 %v1113, 64
    %v1981 = vpop.permute.xlu0 %1980
    %1982 = vrot.lane.b32.xlu0 %v1281, 64
    %v1983 = vpop.permute.xlu0 %1982
    %1984 = vrot.lane.b32.xlu0 %v1283, 64
    %v1985 = vpop.permute.xlu0 %1984
    %2050 = vrot.lane.b32.xlu0 %v1122, 80
    %v2051 = vpop.permute.xlu0 %2050
    %2052 = vrot.lane.b32.xlu0 %v1124, 80
    %v2053 = vpop.permute.xlu0 %2052
    %2054 = vrot.lane.b32.xlu0 %v1127, 80
    %v2055 = vpop.permute.xlu0 %2054
    %2056 = vrot.lane.b32.xlu0 %v1129, 80
    %v2057 = vpop.permute.xlu0 %2056
    %2058 = vrot.lane.b32.xlu0 %v1132, 80
    %v2059 = vpop.permute.xlu0 %2058
    %2060 = vrot.lane.b32.xlu0 %v1134, 80
    %v2061 = vpop.permute.xlu0 %2060
    %2062 = vrot.lane.b32.xlu0 %v1137, 80
    %v2063 = vpop.permute.xlu0 %2062
    %2064 = vrot.lane.b32.xlu0 %v1139, 80
    %v2065 = vpop.permute.xlu0 %2064
    %2066 = vrot.lane.b32.xlu0 %v1142, 80
    %v2067 = vpop.permute.xlu0 %2066
    %2068 = vrot.lane.b32.xlu0 %v1144, 80
    %v2069 = vpop.permute.xlu0 %2068
    %2070 = vrot.lane.b32.xlu0 %v1147, 80
    %v2071 = vpop.permute.xlu0 %2070
    %2072 = vrot.lane.b32.xlu0 %v1149, 80
    %v2073 = vpop.permute.xlu0 %2072
    %2074 = vrot.lane.b32.xlu0 %v1152, 80
    %v2075 = vpop.permute.xlu0 %2074
    %2076 = vrot.lane.b32.xlu0 %v1154, 80
    %v2077 = vpop.permute.xlu0 %2076
    %2078 = vrot.lane.b32.xlu0 %v1157, 80
    %v2079 = vpop.permute.xlu0 %2078
    %2080 = vrot.lane.b32.xlu0 %v1159, 80
    %v2081 = vpop.permute.xlu0 %2080
    %2082 = vrot.lane.b32.xlu0 %v1162, 80
    %v2083 = vpop.permute.xlu0 %2082
    %2084 = vrot.lane.b32.xlu0 %v1164, 80
    %v2085 = vpop.permute.xlu0 %2084
    %2086 = vrot.lane.b32.xlu0 %v1167, 80
    %v2087 = vpop.permute.xlu0 %2086
    %2088 = vrot.lane.b32.xlu0 %v1169, 80
    %v2089 = vpop.permute.xlu0 %2088
    %2090 = vrot.lane.b32.xlu0 %v1172, 80
    %v2091 = vpop.permute.xlu0 %2090
    %2092 = vrot.lane.b32.xlu0 %v1174, 80
    %v2093 = vpop.permute.xlu0 %2092
    %2094 = vrot.lane.b32.xlu0 %v1177, 80
    %v2095 = vpop.permute.xlu0 %2094
    %2096 = vrot.lane.b32.xlu0 %v1179, 80
    %v2097 = vpop.permute.xlu0 %2096
    %2098 = vrot.lane.b32.xlu0 %v1182, 80
    %v2099 = vpop.permute.xlu0 %2098
    %2100 = vrot.lane.b32.xlu0 %v1184, 80
    %v2101 = vpop.permute.xlu0 %2100
    %2102 = vrot.lane.b32.xlu0 %v1187, 80
    %v2103 = vpop.permute.xlu0 %2102
    %2104 = vrot.lane.b32.xlu0 %v1189, 80
    %v2105 = vpop.permute.xlu0 %2104
    %2106 = vrot.lane.b32.xlu0 %v1192, 80
    %v2107 = vpop.permute.xlu0 %2106
    %2108 = vrot.lane.b32.xlu0 %v1194, 80
    %v2109 = vpop.permute.xlu0 %2108
    %2110 = vrot.lane.b32.xlu0 %v1286, 80
    %v2111 = vpop.permute.xlu0 %2110
    %2112 = vrot.lane.b32.xlu0 %v1288, 80
    %v2113 = vpop.permute.xlu0 %2112
    %2114 = vrot.lane.b32.xlu0 %v1197, 80
    %v2115 = vpop.permute.xlu0 %2114
    %2116 = vrot.lane.b32.xlu0 %v1199, 80
    %v2117 = vpop.permute.xlu0 %2116
    %2118 = vrot.lane.b32.xlu0 %v1202, 80
    %v2119 = vpop.permute.xlu0 %2118
    %2120 = vrot.lane.b32.xlu0 %v1204, 80
    %v2121 = vpop.permute.xlu0 %2120
    %2122 = vrot.lane.b32.xlu0 %v1207, 80
    %v2123 = vpop.permute.xlu0 %2122
    %2124 = vrot.lane.b32.xlu0 %v1209, 80
    %v2125 = vpop.permute.xlu0 %2124
    %2126 = vrot.lane.b32.xlu0 %v1212, 80
    %v2127 = vpop.permute.xlu0 %2126
    %2128 = vrot.lane.b32.xlu0 %v1214, 80
    %v2129 = vpop.permute.xlu0 %2128
    %2130 = vrot.lane.b32.xlu0 %v1217, 80
    %v2131 = vpop.permute.xlu0 %2130
    %2132 = vrot.lane.b32.xlu0 %v1219, 80
    %v2133 = vpop.permute.xlu0 %2132
    %2134 = vrot.lane.b32.xlu0 %v1222, 80
    %v2135 = vpop.permute.xlu0 %2134
    %2136 = vrot.lane.b32.xlu0 %v1224, 80
    %v2137 = vpop.permute.xlu0 %2136
    %2138 = vrot.lane.b32.xlu0 %v1227, 80
    %v2139 = vpop.permute.xlu0 %2138
    %2140 = vrot.lane.b32.xlu0 %v1229, 80
    %v2141 = vpop.permute.xlu0 %2140
    %2142 = vrot.lane.b32.xlu0 %v1232, 80
    %v2143 = vpop.permute.xlu0 %2142
    %2144 = vrot.lane.b32.xlu0 %v1234, 80
    %v2145 = vpop.permute.xlu0 %2144
    %2146 = vrot.lane.b32.xlu0 %v1237, 80
    %v2147 = vpop.permute.xlu0 %2146
    %2148 = vrot.lane.b32.xlu0 %v1239, 80
    %v2149 = vpop.permute.xlu0 %2148
    %2150 = vrot.lane.b32.xlu0 %v1242, 80
    %v2151 = vpop.permute.xlu0 %2150
    %2152 = vrot.lane.b32.xlu0 %v1244, 80
    %v2153 = vpop.permute.xlu0 %2152
    %2154 = vrot.lane.b32.xlu0 %v1247, 80
    %v2155 = vpop.permute.xlu0 %2154
    %2156 = vrot.lane.b32.xlu0 %v1249, 80
    %v2157 = vpop.permute.xlu0 %2156
    %2158 = vrot.lane.b32.xlu0 %v1252, 80
    %v2159 = vpop.permute.xlu0 %2158
    %2160 = vrot.lane.b32.xlu0 %v1254, 80
    %v2161 = vpop.permute.xlu0 %2160
    %2162 = vrot.lane.b32.xlu0 %v1257, 80
    %v2163 = vpop.permute.xlu0 %2162
    %2164 = vrot.lane.b32.xlu0 %v1259, 80
    %v2165 = vpop.permute.xlu0 %2164
    %2166 = vrot.lane.b32.xlu0 %v1262, 80
    %v2167 = vpop.permute.xlu0 %2166
    %2168 = vrot.lane.b32.xlu0 %v1264, 80
    %v2169 = vpop.permute.xlu0 %2168
    %2170 = vrot.lane.b32.xlu0 %v1267, 80
    %v2171 = vpop.permute.xlu0 %2170
    %2172 = vrot.lane.b32.xlu0 %v1269, 80
    %v2173 = vpop.permute.xlu0 %2172
    %2174 = vrot.lane.b32.xlu0 %v1291, 80
    %v2175 = vpop.permute.xlu0 %2174
    %2176 = vrot.lane.b32.xlu0 %v1293, 80
    %v2177 = vpop.permute.xlu0 %2176
    %2242 = vrot.lane.b32.xlu0 %v832, 96
    %v2243 = vpop.permute.xlu0 %2242
    %2244 = vrot.lane.b32.xlu0 %v643, 96
    %v2245 = vpop.permute.xlu0 %2244
    %2246 = vrot.lane.b32.xlu0 %v833, 96
    %v2247 = vpop.permute.xlu0 %2246
    %2248 = vrot.lane.b32.xlu0 %v646, 96
    %v2249 = vpop.permute.xlu0 %2248
    %2250 = vrot.lane.b32.xlu0 %v834, 96
    %v2251 = vpop.permute.xlu0 %2250
    %2252 = vrot.lane.b32.xlu0 %v649, 96
    %v2253 = vpop.permute.xlu0 %2252
    %2254 = vrot.lane.b32.xlu0 %v835, 96
    %v2255 = vpop.permute.xlu0 %2254
    %2256 = vrot.lane.b32.xlu0 %v652, 96
    %v2257 = vpop.permute.xlu0 %2256
    %2258 = vrot.lane.b32.xlu0 %v836, 96
    %v2259 = vpop.permute.xlu0 %2258
    %2260 = vrot.lane.b32.xlu0 %v655, 96
    %v2261 = vpop.permute.xlu0 %2260
    %2262 = vrot.lane.b32.xlu0 %v837, 96
    %v2263 = vpop.permute.xlu0 %2262
    %2264 = vrot.lane.b32.xlu0 %v658, 96
    %v2265 = vpop.permute.xlu0 %2264
    %2266 = vrot.lane.b32.xlu0 %v838, 96
    %v2267 = vpop.permute.xlu0 %2266
    %2268 = vrot.lane.b32.xlu0 %v661, 96
    %v2269 = vpop.permute.xlu0 %2268
    %2270 = vrot.lane.b32.xlu0 %v839, 96
    %v2271 = vpop.permute.xlu0 %2270
    %2272 = vrot.lane.b32.xlu0 %v664, 96
    %v2273 = vpop.permute.xlu0 %2272
    %2274 = vrot.lane.b32.xlu0 %v840, 96
    %v2275 = vpop.permute.xlu0 %2274
    %2276 = vrot.lane.b32.xlu0 %v667, 96
    %v2277 = vpop.permute.xlu0 %2276
    %2278 = vrot.lane.b32.xlu0 %v841, 96
    %v2279 = vpop.permute.xlu0 %2278
    %2280 = vrot.lane.b32.xlu0 %v670, 96
    %v2281 = vpop.permute.xlu0 %2280
    %2282 = vrot.lane.b32.xlu0 %v842, 96
    %v2283 = vpop.permute.xlu0 %2282
    %2284 = vrot.lane.b32.xlu0 %v673, 96
    %v2285 = vpop.permute.xlu0 %2284
    %2286 = vrot.lane.b32.xlu0 %v843, 96
    %v2287 = vpop.permute.xlu0 %2286
    %2288 = vrot.lane.b32.xlu0 %v676, 96
    %v2289 = vpop.permute.xlu0 %2288
    %2290 = vrot.lane.b32.xlu0 %v844, 96
    %v2291 = vpop.permute.xlu0 %2290
    %2292 = vrot.lane.b32.xlu0 %v679, 96
    %v2293 = vpop.permute.xlu0 %2292
    %2294 = vrot.lane.b32.xlu0 %v845, 96
    %v2295 = vpop.permute.xlu0 %2294
    %2296 = vrot.lane.b32.xlu0 %v682, 96
    %v2297 = vpop.permute.xlu0 %2296
    %2298 = vrot.lane.b32.xlu0 %v846, 96
    %v2299 = vpop.permute.xlu0 %2298
    %2300 = vrot.lane.b32.xlu0 %v685, 96
    %v2301 = vpop.permute.xlu0 %2300
    %2302 = vrot.lane.b32.xlu0 %v830, 96
    %v2303 = vpop.permute.xlu0 %2302
    %2304 = vrot.lane.b32.xlu0 %v637, 96
    %v2305 = vpop.permute.xlu0 %2304
    %2306 = vrot.lane.b32.xlu0 %v848, 96
    %v2307 = vpop.permute.xlu0 %2306
    %2308 = vrot.lane.b32.xlu0 %v691, 96
    %v2309 = vpop.permute.xlu0 %2308
    %2310 = vrot.lane.b32.xlu0 %v849, 96
    %v2311 = vpop.permute.xlu0 %2310
    %2312 = vrot.lane.b32.xlu0 %v694, 96
    %v2313 = vpop.permute.xlu0 %2312
    %2314 = vrot.lane.b32.xlu0 %v850, 96
    %v2315 = vpop.permute.xlu0 %2314
    %2316 = vrot.lane.b32.xlu0 %v697, 96
    %v2317 = vpop.permute.xlu0 %2316
    %2318 = vrot.lane.b32.xlu0 %v851, 96
    %v2319 = vpop.permute.xlu0 %2318
    %2320 = vrot.lane.b32.xlu0 %v700, 96
    %v2321 = vpop.permute.xlu0 %2320
    %2322 = vrot.lane.b32.xlu0 %v852, 96
    %v2323 = vpop.permute.xlu0 %2322
    %2324 = vrot.lane.b32.xlu0 %v703, 96
    %v2325 = vpop.permute.xlu0 %2324
    %2326 = vrot.lane.b32.xlu0 %v853, 96
    %v2327 = vpop.permute.xlu0 %2326
    %2328 = vrot.lane.b32.xlu0 %v706, 96
    %v2329 = vpop.permute.xlu0 %2328
    %2330 = vrot.lane.b32.xlu0 %v854, 96
    %v2331 = vpop.permute.xlu0 %2330
    %2332 = vrot.lane.b32.xlu0 %v709, 96
    %v2333 = vpop.permute.xlu0 %2332
    %2334 = vrot.lane.b32.xlu0 %v855, 96
    %v2335 = vpop.permute.xlu0 %2334
    %2336 = vrot.lane.b32.xlu0 %v712, 96
    %v2337 = vpop.permute.xlu0 %2336
    %2338 = vrot.lane.b32.xlu0 %v856, 96
    %v2339 = vpop.permute.xlu0 %2338
    %2340 = vrot.lane.b32.xlu0 %v715, 96
    %v2341 = vpop.permute.xlu0 %2340
    %2342 = vrot.lane.b32.xlu0 %v857, 96
    %v2343 = vpop.permute.xlu0 %2342
    %2344 = vrot.lane.b32.xlu0 %v718, 96
    %v2345 = vpop.permute.xlu0 %2344
    %2346 = vrot.lane.b32.xlu0 %v858, 96
    %v2347 = vpop.permute.xlu0 %2346
    %2348 = vrot.lane.b32.xlu0 %v721, 96
    %v2349 = vpop.permute.xlu0 %2348
    %2350 = vrot.lane.b32.xlu0 %v859, 96
    %v2351 = vpop.permute.xlu0 %2350
    %2352 = vrot.lane.b32.xlu0 %v724, 96
    %v2353 = vpop.permute.xlu0 %2352
    %2354 = vrot.lane.b32.xlu0 %v860, 96
    %v2355 = vpop.permute.xlu0 %2354
    %2356 = vrot.lane.b32.xlu0 %v727, 96
    %v2357 = vpop.permute.xlu0 %2356
    %2358 = vrot.lane.b32.xlu0 %v861, 96
    %v2359 = vpop.permute.xlu0 %2358
    %2360 = vrot.lane.b32.xlu0 %v730, 96
    %v2361 = vpop.permute.xlu0 %2360
    %2362 = vrot.lane.b32.xlu0 %v862, 96
    %v2363 = vpop.permute.xlu0 %2362
    %2364 = vrot.lane.b32.xlu0 %v733, 96
    %v2365 = vpop.permute.xlu0 %2364
    %2428 = vrot.lane.b32.xlu0 %v971, 112
    %v2429 = vpop.permute.xlu0 %2428
    %2430 = vrot.lane.b32.xlu0 %v973, 112
    %v2431 = vpop.permute.xlu0 %2430
    %2432 = vrot.lane.b32.xlu0 %v976, 112
    %v2433 = vpop.permute.xlu0 %2432
    %2434 = vrot.lane.b32.xlu0 %v978, 112
    %v2435 = vpop.permute.xlu0 %2434
    %2436 = vrot.lane.b32.xlu0 %v981, 112
    %v2437 = vpop.permute.xlu0 %2436
    %2438 = vrot.lane.b32.xlu0 %v983, 112
    %v2439 = vpop.permute.xlu0 %2438
    %2440 = vrot.lane.b32.xlu0 %v986, 112
    %v2441 = vpop.permute.xlu0 %2440
    %2442 = vrot.lane.b32.xlu0 %v988, 112
    %v2443 = vpop.permute.xlu0 %2442
    %2444 = vrot.lane.b32.xlu0 %v991, 112
    %v2445 = vpop.permute.xlu0 %2444
    %2446 = vrot.lane.b32.xlu0 %v993, 112
    %v2447 = vpop.permute.xlu0 %2446
    %2448 = vrot.lane.b32.xlu0 %v996, 112
    %v2449 = vpop.permute.xlu0 %2448
    %2450 = vrot.lane.b32.xlu0 %v998, 112
    %v2451 = vpop.permute.xlu0 %2450
    %2452 = vrot.lane.b32.xlu0 %v1001, 112
    %v2453 = vpop.permute.xlu0 %2452
    %2454 = vrot.lane.b32.xlu0 %v1003, 112
    %v2455 = vpop.permute.xlu0 %2454
    %2456 = vrot.lane.b32.xlu0 %v1006, 112
    %v2457 = vpop.permute.xlu0 %2456
    %2458 = vrot.lane.b32.xlu0 %v1008, 112
    %v2459 = vpop.permute.xlu0 %2458
    %2460 = vrot.lane.b32.xlu0 %v1011, 112
    %v2461 = vpop.permute.xlu0 %2460
    %2462 = vrot.lane.b32.xlu0 %v1013, 112
    %v2463 = vpop.permute.xlu0 %2462
    %2464 = vrot.lane.b32.xlu0 %v1016, 112
    %v2465 = vpop.permute.xlu0 %2464
    %2466 = vrot.lane.b32.xlu0 %v1018, 112
    %v2467 = vpop.permute.xlu0 %2466
    %2468 = vrot.lane.b32.xlu0 %v1021, 112
    %v2469 = vpop.permute.xlu0 %2468
    %2470 = vrot.lane.b32.xlu0 %v1023, 112
    %v2471 = vpop.permute.xlu0 %2470
    %2472 = vrot.lane.b32.xlu0 %v1026, 112
    %v2473 = vpop.permute.xlu0 %2472
    %2474 = vrot.lane.b32.xlu0 %v1028, 112
    %v2475 = vpop.permute.xlu0 %2474
    %2476 = vrot.lane.b32.xlu0 %v1031, 112
    %v2477 = vpop.permute.xlu0 %2476
    %2478 = vrot.lane.b32.xlu0 %v1033, 112
    %v2479 = vpop.permute.xlu0 %2478
    %2480 = vrot.lane.b32.xlu0 %v1036, 112
    %v2481 = vpop.permute.xlu0 %2480
    %2482 = vrot.lane.b32.xlu0 %v1038, 112
    %v2483 = vpop.permute.xlu0 %2482
    %2484 = vrot.lane.b32.xlu0 %v1276, 112
    %v2485 = vpop.permute.xlu0 %2484
    %2486 = vrot.lane.b32.xlu0 %v1278, 112
    %v2487 = vpop.permute.xlu0 %2486
    %2488 = vrot.lane.b32.xlu0 %v961, 112
    %v2489 = vpop.permute.xlu0 %2488
    %2490 = vrot.lane.b32.xlu0 %v963, 112
    %v2491 = vpop.permute.xlu0 %2490
    %2492 = vrot.lane.b32.xlu0 %v1046, 112
    %v2493 = vpop.permute.xlu0 %2492
    %2494 = vrot.lane.b32.xlu0 %v1048, 112
    %v2495 = vpop.permute.xlu0 %2494
    %2496 = vrot.lane.b32.xlu0 %v1051, 112
    %v2497 = vpop.permute.xlu0 %2496
    %2498 = vrot.lane.b32.xlu0 %v1053, 112
    %v2499 = vpop.permute.xlu0 %2498
    %2500 = vrot.lane.b32.xlu0 %v1056, 112
    %v2501 = vpop.permute.xlu0 %2500
    %2502 = vrot.lane.b32.xlu0 %v1058, 112
    %v2503 = vpop.permute.xlu0 %2502
    %2504 = vrot.lane.b32.xlu0 %v1061, 112
    %v2505 = vpop.permute.xlu0 %2504
    %2506 = vrot.lane.b32.xlu0 %v1063, 112
    %v2507 = vpop.permute.xlu0 %2506
    %2508 = vrot.lane.b32.xlu0 %v1066, 112
    %v2509 = vpop.permute.xlu0 %2508
    %2510 = vrot.lane.b32.xlu0 %v1068, 112
    %v2511 = vpop.permute.xlu0 %2510
    %2512 = vrot.lane.b32.xlu0 %v1071, 112
    %v2513 = vpop.permute.xlu0 %2512
    %2514 = vrot.lane.b32.xlu0 %v1073, 112
    %v2515 = vpop.permute.xlu0 %2514
    %2516 = vrot.lane.b32.xlu0 %v1076, 112
    %v2517 = vpop.permute.xlu0 %2516
    %2518 = vrot.lane.b32.xlu0 %v1078, 112
    %v2519 = vpop.permute.xlu0 %2518
    %2520 = vrot.lane.b32.xlu0 %v1081, 112
    %v2521 = vpop.permute.xlu0 %2520
    %2522 = vrot.lane.b32.xlu0 %v1083, 112
    %v2523 = vpop.permute.xlu0 %2522
    %2524 = vrot.lane.b32.xlu0 %v1086, 112
    %v2525 = vpop.permute.xlu0 %2524
    %2526 = vrot.lane.b32.xlu0 %v1088, 112
    %v2527 = vpop.permute.xlu0 %2526
    %2528 = vrot.lane.b32.xlu0 %v1091, 112
    %v2529 = vpop.permute.xlu0 %2528
    %2530 = vrot.lane.b32.xlu0 %v1093, 112
    %v2531 = vpop.permute.xlu0 %2530
    %2532 = vrot.lane.b32.xlu0 %v1096, 112
    %v2533 = vpop.permute.xlu0 %2532
    %2534 = vrot.lane.b32.xlu0 %v1098, 112
    %v2535 = vpop.permute.xlu0 %2534
    %2536 = vrot.lane.b32.xlu0 %v1101, 112
    %v2537 = vpop.permute.xlu0 %2536
    %2538 = vrot.lane.b32.xlu0 %v1103, 112
    %v2539 = vpop.permute.xlu0 %2538
    %2540 = vrot.lane.b32.xlu0 %v1106, 112
    %v2541 = vpop.permute.xlu0 %2540
    %2542 = vrot.lane.b32.xlu0 %v1108, 112
    %v2543 = vpop.permute.xlu0 %2542
    %2544 = vrot.lane.b32.xlu0 %v1111, 112
    %v2545 = vpop.permute.xlu0 %2544
    %2546 = vrot.lane.b32.xlu0 %v1113, 112
    %v2547 = vpop.permute.xlu0 %2546
    %2548 = vrot.lane.b32.xlu0 %v1281, 112
    %v2549 = vpop.permute.xlu0 %2548
    %2550 = vrot.lane.b32.xlu0 %v1283, 112
    %v2551 = vpop.permute.xlu0 %2550
    %vm2614 = vcmask 130048
    %v2615 = vsel %vm2614, %v830, %v1295
    %v2616 = vsel %vm2614, %v637, %v1297
    %v2617 = vsel %vm2614, %v831, %v1299
    %v2618 = vsel %vm2614, %v640, %v1301
    %v2619 = vsel %vm2614, %v832, %v1303
    %v2620 = vsel %vm2614, %v643, %v1305
    %v2621 = vsel %vm2614, %v833, %v1307
    %v2622 = vsel %vm2614, %v646, %v1309
    %v2623 = vsel %vm2614, %v834, %v1311
    %v2624 = vsel %vm2614, %v649, %v1313
    %v2625 = vsel %vm2614, %v835, %v1315
    %v2626 = vsel %vm2614, %v652, %v1317
    %v2627 = vsel %vm2614, %v836, %v1319
    %v2628 = vsel %vm2614, %v655, %v1321
    %v2629 = vsel %vm2614, %v837, %v1323
    %v2630 = vsel %vm2614, %v658, %v1325
    %v2631 = vsel %vm2614, %v838, %v1327
    %v2632 = vsel %vm2614, %v661, %v1329
    %v2633 = vsel %vm2614, %v839, %v1331
    %v2634 = vsel %vm2614, %v664, %v1333
    %v2635 = vsel %vm2614, %v840, %v1335
    %v2636 = vsel %vm2614, %v667, %v1337
    %v2637 = vsel %vm2614, %v841, %v1339
    %v2638 = vsel %vm2614, %v670, %v1341
    %v2639 = vsel %vm2614, %v842, %v1343
    %v2640 = vsel %vm2614, %v673, %v1345
    %v2641 = vsel %vm2614, %v843, %v1347
    %v2642 = vsel %vm2614, %v676, %v1349
    %v2643 = vsel %vm2614, %v844, %v1351
    %v2644 = vsel %vm2614, %v679, %v1353
    %v2645 = vsel %vm2614, %v845, %v1355
    %v2646 = vsel %vm2614, %v682, %v1357
    %v2647 = vsel %vm2614, %v847, %v1359
    %v2648 = vsel %vm2614, %v688, %v1361
    %v2649 = vsel %vm2614, %v848, %v1363
    %v2650 = vsel %vm2614, %v691, %v1365
    %v2651 = vsel %vm2614, %v849, %v1367
    %v2652 = vsel %vm2614, %v694, %v1369
    %v2653 = vsel %vm2614, %v850, %v1371
    %v2654 = vsel %vm2614, %v697, %v1373
    %v2655 = vsel %vm2614, %v851, %v1375
    %v2656 = vsel %vm2614, %v700, %v1377
    %v2657 = vsel %vm2614, %v852, %v1379
    %v2658 = vsel %vm2614, %v703, %v1381
    %v2659 = vsel %vm2614, %v853, %v1383
    %v2660 = vsel %vm2614, %v706, %v1385
    %v2661 = vsel %vm2614, %v854, %v1387
    %v2662 = vsel %vm2614, %v709, %v1389
    %v2663 = vsel %vm2614, %v855, %v1391
    %v2664 = vsel %vm2614, %v712, %v1393
    %v2665 = vsel %vm2614, %v856, %v1395
    %v2666 = vsel %vm2614, %v715, %v1397
    %v2667 = vsel %vm2614, %v857, %v1399
    %v2668 = vsel %vm2614, %v718, %v1401
    %v2669 = vsel %vm2614, %v858, %v1403
    %v2670 = vsel %vm2614, %v721, %v1405
    %v2671 = vsel %vm2614, %v859, %v1407
    %v2672 = vsel %vm2614, %v724, %v1409
    %v2673 = vsel %vm2614, %v860, %v1411
    %v2674 = vsel %vm2614, %v727, %v1413
    %v2675 = vsel %vm2614, %v861, %v1415
    %v2676 = vsel %vm2614, %v730, %v1417
    %vm2677 = vcmask 261120
    %v2678 = vsel %vm2677, %v2615, %v1481
    %v2679 = vsel %vm2677, %v2616, %v1483
    %v2680 = vsel %vm2677, %v2617, %v1485
    %v2681 = vsel %vm2677, %v2618, %v1487
    %v2682 = vsel %vm2677, %v2619, %v1489
    %v2683 = vsel %vm2677, %v2620, %v1491
    %v2684 = vsel %vm2677, %v2621, %v1493
    %v2685 = vsel %vm2677, %v2622, %v1495
    %v2686 = vsel %vm2677, %v2623, %v1497
    %v2687 = vsel %vm2677, %v2624, %v1499
    %v2688 = vsel %vm2677, %v2625, %v1501
    %v2689 = vsel %vm2677, %v2626, %v1503
    %v2690 = vsel %vm2677, %v2627, %v1505
    %v2691 = vsel %vm2677, %v2628, %v1507
    %v2692 = vsel %vm2677, %v2629, %v1509
    %v2693 = vsel %vm2677, %v2630, %v1511
    %v2694 = vsel %vm2677, %v2631, %v1513
    %v2695 = vsel %vm2677, %v2632, %v1515
    %v2696 = vsel %vm2677, %v2633, %v1517
    %v2697 = vsel %vm2677, %v2634, %v1519
    %v2698 = vsel %vm2677, %v2635, %v1521
    %v2699 = vsel %vm2677, %v2636, %v1523
    %v2700 = vsel %vm2677, %v2637, %v1525
    %v2701 = vsel %vm2677, %v2638, %v1527
    %v2702 = vsel %vm2677, %v2639, %v1529
    %v2703 = vsel %vm2677, %v2640, %v1531
    %v2704 = vsel %vm2677, %v2641, %v1533
    %v2705 = vsel %vm2677, %v2642, %v1535
    %v2706 = vsel %vm2677, %v2643, %v1537
    %v2707 = vsel %vm2677, %v2644, %v1539
    %v2708 = vsel %vm2677, %v2645, %v1541
    %v2709 = vsel %vm2677, %v2646, %v1543
    %v2710 = vsel %vm2677, %v2647, %v1545
    %v2711 = vsel %vm2677, %v2648, %v1547
    %v2712 = vsel %vm2677, %v2649, %v1549
    %v2713 = vsel %vm2677, %v2650, %v1551
    %v2714 = vsel %vm2677, %v2651, %v1553
    %v2715 = vsel %vm2677, %v2652, %v1555
    %v2716 = vsel %vm2677, %v2653, %v1557
    %v2717 = vsel %vm2677, %v2654, %v1559
    %v2718 = vsel %vm2677, %v2655, %v1561
    %v2719 = vsel %vm2677, %v2656, %v1563
    %v2720 = vsel %vm2677, %v2657, %v1565
    %v2721 = vsel %vm2677, %v2658, %v1567
    %v2722 = vsel %vm2677, %v2659, %v1569
    %v2723 = vsel %vm2677, %v2660, %v1571
    %v2724 = vsel %vm2677, %v2661, %v1573
    %v2725 = vsel %vm2677, %v2662, %v1575
    %v2726 = vsel %vm2677, %v2663, %v1577
    %v2727 = vsel %vm2677, %v2664, %v1579
    %v2728 = vsel %vm2677, %v2665, %v1581
    %v2729 = vsel %vm2677, %v2666, %v1583
    %v2730 = vsel %vm2677, %v2667, %v1585
    %v2731 = vsel %vm2677, %v2668, %v1587
    %v2732 = vsel %vm2677, %v2669, %v1589
    %v2733 = vsel %vm2677, %v2670, %v1591
    %v2734 = vsel %vm2677, %v2671, %v1593
    %v2735 = vsel %vm2677, %v2672, %v1595
    %v2736 = vsel %vm2677, %v2673, %v1597
    %v2737 = vsel %vm2677, %v2674, %v1599
    %v2738 = vsel %vm2677, %v2675, %v1601
    %v2739 = vsel %vm2677, %v2676, %v1603
    %vm2740 = vcmask 392192
    %v2741 = vsel %vm2740, %v2678, %v1667
    %v2742 = vsel %vm2740, %v2679, %v1669
    %v2743 = vsel %vm2740, %v2680, %v1671
    %v2744 = vsel %vm2740, %v2681, %v1673
    %v2745 = vsel %vm2740, %v2682, %v1675
    %v2746 = vsel %vm2740, %v2683, %v1677
    %v2747 = vsel %vm2740, %v2684, %v1679
    %v2748 = vsel %vm2740, %v2685, %v1681
    %v2749 = vsel %vm2740, %v2686, %v1683
    %v2750 = vsel %vm2740, %v2687, %v1685
    %v2751 = vsel %vm2740, %v2688, %v1687
    %v2752 = vsel %vm2740, %v2689, %v1689
    %v2753 = vsel %vm2740, %v2690, %v1691
    %v2754 = vsel %vm2740, %v2691, %v1693
    %v2755 = vsel %vm2740, %v2692, %v1695
    %v2756 = vsel %vm2740, %v2693, %v1697
    %v2757 = vsel %vm2740, %v2694, %v1699
    %v2758 = vsel %vm2740, %v2695, %v1701
    %v2759 = vsel %vm2740, %v2696, %v1703
    %v2760 = vsel %vm2740, %v2697, %v1705
    %v2761 = vsel %vm2740, %v2698, %v1707
    %v2762 = vsel %vm2740, %v2699, %v1709
    %v2763 = vsel %vm2740, %v2700, %v1711
    %v2764 = vsel %vm2740, %v2701, %v1713
    %v2765 = vsel %vm2740, %v2702, %v1715
    %v2766 = vsel %vm2740, %v2703, %v1717
    %v2767 = vsel %vm2740, %v2704, %v1719
    %v2768 = vsel %vm2740, %v2705, %v1721
    %v2769 = vsel %vm2740, %v2706, %v1723
    %v2770 = vsel %vm2740, %v2707, %v1725
    %v2771 = vsel %vm2740, %v2708, %v1727
    %v2772 = vsel %vm2740, %v2709, %v1729
    %v2773 = vsel %vm2740, %v2678, %v1731
    %v2774 = vsel %vm2740, %v2679, %v1733
    %v2775 = vsel %vm2740, %v2710, %v1735
    %v2776 = vsel %vm2740, %v2711, %v1737
    %v2777 = vsel %vm2740, %v2712, %v1739
    %v2778 = vsel %vm2740, %v2713, %v1741
    %v2779 = vsel %vm2740, %v2714, %v1743
    %v2780 = vsel %vm2740, %v2715, %v1745
    %v2781 = vsel %vm2740, %v2716, %v1747
    %v2782 = vsel %vm2740, %v2717, %v1749
    %v2783 = vsel %vm2740, %v2718, %v1751
    %v2784 = vsel %vm2740, %v2719, %v1753
    %v2785 = vsel %vm2740, %v2720, %v1755
    %v2786 = vsel %vm2740, %v2721, %v1757
    %v2787 = vsel %vm2740, %v2722, %v1759
    %v2788 = vsel %vm2740, %v2723, %v1761
    %v2789 = vsel %vm2740, %v2724, %v1763
    %v2790 = vsel %vm2740, %v2725, %v1765
    %v2791 = vsel %vm2740, %v2726, %v1767
    %v2792 = vsel %vm2740, %v2727, %v1769
    %v2793 = vsel %vm2740, %v2728, %v1771
    %v2794 = vsel %vm2740, %v2729, %v1773
    %v2795 = vsel %vm2740, %v2730, %v1775
    %v2796 = vsel %vm2740, %v2731, %v1777
    %v2797 = vsel %vm2740, %v2732, %v1779
    %v2798 = vsel %vm2740, %v2733, %v1781
    %v2799 = vsel %vm2740, %v2734, %v1783
    %v2800 = vsel %vm2740, %v2735, %v1785
    %v2801 = vsel %vm2740, %v2736, %v1787
    %v2802 = vsel %vm2740, %v2737, %v1789
    %v2803 = vsel %vm2740, %v2738, %v1791
    %v2804 = vsel %vm2740, %v2739, %v1793
    %vm2805 = vcmask 523264
    %v2806 = vsel %vm2805, %v2741, %v1859
    %v2807 = vsel %vm2805, %v2742, %v1861
    %v2808 = vsel %vm2805, %v2743, %v1863
    %v2809 = vsel %vm2805, %v2744, %v1865
    %v2810 = vsel %vm2805, %v2745, %v1867
    %v2811 = vsel %vm2805, %v2746, %v1869
    %v2812 = vsel %vm2805, %v2747, %v1871
    %v2813 = vsel %vm2805, %v2748, %v1873
    %v2814 = vsel %vm2805, %v2749, %v1875
    %v2815 = vsel %vm2805, %v2750, %v1877
    %v2816 = vsel %vm2805, %v2751, %v1879
    %v2817 = vsel %vm2805, %v2752, %v1881
    %v2818 = vsel %vm2805, %v2753, %v1883
    %v2819 = vsel %vm2805, %v2754, %v1885
    %v2820 = vsel %vm2805, %v2755, %v1887
    %v2821 = vsel %vm2805, %v2756, %v1889
    %v2822 = vsel %vm2805, %v2757, %v1891
    %v2823 = vsel %vm2805, %v2758, %v1893
    %v2824 = vsel %vm2805, %v2759, %v1895
    %v2825 = vsel %vm2805, %v2760, %v1897
    %v2826 = vsel %vm2805, %v2761, %v1899
    %v2827 = vsel %vm2805, %v2762, %v1901
    %v2828 = vsel %vm2805, %v2763, %v1903
    %v2829 = vsel %vm2805, %v2764, %v1905
    %v2830 = vsel %vm2805, %v2765, %v1907
    %v2831 = vsel %vm2805, %v2766, %v1909
    %v2832 = vsel %vm2805, %v2767, %v1911
    %v2833 = vsel %vm2805, %v2768, %v1913
    %v2834 = vsel %vm2805, %v2769, %v1915
    %v2835 = vsel %vm2805, %v2770, %v1917
    %v2836 = vsel %vm2805, %v2771, %v1919
    %v2837 = vsel %vm2805, %v2772, %v1921
    %v2838 = vsel %vm2805, %v2773, %v1923
    %v2839 = vsel %vm2805, %v2774, %v1925
    %v2840 = vsel %vm2805, %v2775, %v1927
    %v2841 = vsel %vm2805, %v2776, %v1929
    %v2842 = vsel %vm2805, %v2777, %v1931
    %v2843 = vsel %vm2805, %v2778, %v1933
    %v2844 = vsel %vm2805, %v2779, %v1935
    %v2845 = vsel %vm2805, %v2780, %v1937
    %v2846 = vsel %vm2805, %v2781, %v1939
    %v2847 = vsel %vm2805, %v2782, %v1941
    %v2848 = vsel %vm2805, %v2783, %v1943
    %v2849 = vsel %vm2805, %v2784, %v1945
    %v2850 = vsel %vm2805, %v2785, %v1947
    %v2851 = vsel %vm2805, %v2786, %v1949
    %v2852 = vsel %vm2805, %v2787, %v1951
    %v2853 = vsel %vm2805, %v2788, %v1953
    %v2854 = vsel %vm2805, %v2789, %v1955
    %v2855 = vsel %vm2805, %v2790, %v1957
    %v2856 = vsel %vm2805, %v2791, %v1959
    %v2857 = vsel %vm2805, %v2792, %v1961
    %v2858 = vsel %vm2805, %v2793, %v1963
    %v2859 = vsel %vm2805, %v2794, %v1965
    %v2860 = vsel %vm2805, %v2795, %v1967
    %v2861 = vsel %vm2805, %v2796, %v1969
    %v2862 = vsel %vm2805, %v2797, %v1971
    %v2863 = vsel %vm2805, %v2798, %v1973
    %v2864 = vsel %vm2805, %v2799, %v1975
    %v2865 = vsel %vm2805, %v2800, %v1977
    %v2866 = vsel %vm2805, %v2801, %v1979
    %v2867 = vsel %vm2805, %v2802, %v1981
    %v2868 = vsel %vm2805, %v2803, %v1983
    %v2869 = vsel %vm2805, %v2804, %v1985
    %vm2870 = vcmask 654336
    %v2871 = vsel %vm2870, %v2806, %v2051
    %v2872 = vsel %vm2870, %v2807, %v2053
    %v2873 = vsel %vm2870, %v2808, %v2055
    %v2874 = vsel %vm2870, %v2809, %v2057
    %v2875 = vsel %vm2870, %v2810, %v2059
    %v2876 = vsel %vm2870, %v2811, %v2061
    %v2877 = vsel %vm2870, %v2812, %v2063
    %v2878 = vsel %vm2870, %v2813, %v2065
    %v2879 = vsel %vm2870, %v2814, %v2067
    %v2880 = vsel %vm2870, %v2815, %v2069
    %v2881 = vsel %vm2870, %v2816, %v2071
    %v2882 = vsel %vm2870, %v2817, %v2073
    %v2883 = vsel %vm2870, %v2818, %v2075
    %v2884 = vsel %vm2870, %v2819, %v2077
    %v2885 = vsel %vm2870, %v2820, %v2079
    %v2886 = vsel %vm2870, %v2821, %v2081
    %v2887 = vsel %vm2870, %v2822, %v2083
    %v2888 = vsel %vm2870, %v2823, %v2085
    %v2889 = vsel %vm2870, %v2824, %v2087
    %v2890 = vsel %vm2870, %v2825, %v2089
    %v2891 = vsel %vm2870, %v2826, %v2091
    %v2892 = vsel %vm2870, %v2827, %v2093
    %v2893 = vsel %vm2870, %v2828, %v2095
    %v2894 = vsel %vm2870, %v2829, %v2097
    %v2895 = vsel %vm2870, %v2830, %v2099
    %v2896 = vsel %vm2870, %v2831, %v2101
    %v2897 = vsel %vm2870, %v2832, %v2103
    %v2898 = vsel %vm2870, %v2833, %v2105
    %v2899 = vsel %vm2870, %v2834, %v2107
    %v2900 = vsel %vm2870, %v2835, %v2109
    %v2901 = vsel %vm2870, %v2836, %v2111
    %v2902 = vsel %vm2870, %v2837, %v2113
    %v2903 = vsel %vm2870, %v2838, %v2115
    %v2904 = vsel %vm2870, %v2839, %v2117
    %v2905 = vsel %vm2870, %v2840, %v2119
    %v2906 = vsel %vm2870, %v2841, %v2121
    %v2907 = vsel %vm2870, %v2842, %v2123
    %v2908 = vsel %vm2870, %v2843, %v2125
    %v2909 = vsel %vm2870, %v2844, %v2127
    %v2910 = vsel %vm2870, %v2845, %v2129
    %v2911 = vsel %vm2870, %v2846, %v2131
    %v2912 = vsel %vm2870, %v2847, %v2133
    %v2913 = vsel %vm2870, %v2848, %v2135
    %v2914 = vsel %vm2870, %v2849, %v2137
    %v2915 = vsel %vm2870, %v2850, %v2139
    %v2916 = vsel %vm2870, %v2851, %v2141
    %v2917 = vsel %vm2870, %v2852, %v2143
    %v2918 = vsel %vm2870, %v2853, %v2145
    %v2919 = vsel %vm2870, %v2854, %v2147
    %v2920 = vsel %vm2870, %v2855, %v2149
    %v2921 = vsel %vm2870, %v2856, %v2151
    %v2922 = vsel %vm2870, %v2857, %v2153
    %v2923 = vsel %vm2870, %v2858, %v2155
    %v2924 = vsel %vm2870, %v2859, %v2157
    %v2925 = vsel %vm2870, %v2860, %v2159
    %v2926 = vsel %vm2870, %v2861, %v2161
    %v2927 = vsel %vm2870, %v2862, %v2163
    %v2928 = vsel %vm2870, %v2863, %v2165
    %v2929 = vsel %vm2870, %v2864, %v2167
    %v2930 = vsel %vm2870, %v2865, %v2169
    %v2931 = vsel %vm2870, %v2866, %v2171
    %v2932 = vsel %vm2870, %v2867, %v2173
    %v2933 = vsel %vm2870, %v2868, %v2175
    %v2934 = vsel %vm2870, %v2869, %v2177
    %vm2935 = vcmask 785408
    %v2936 = vsel %vm2935, %v2871, %v2243
    %v2937 = vsel %vm2935, %v2872, %v2245
    %v2938 = vsel %vm2935, %v2873, %v2247
    %v2939 = vsel %vm2935, %v2874, %v2249
    %v2940 = vsel %vm2935, %v2875, %v2251
    %v2941 = vsel %vm2935, %v2876, %v2253
    %v2942 = vsel %vm2935, %v2877, %v2255
    %v2943 = vsel %vm2935, %v2878, %v2257
    %v2944 = vsel %vm2935, %v2879, %v2259
    %v2945 = vsel %vm2935, %v2880, %v2261
    %v2946 = vsel %vm2935, %v2881, %v2263
    %v2947 = vsel %vm2935, %v2882, %v2265
    %v2948 = vsel %vm2935, %v2883, %v2267
    %v2949 = vsel %vm2935, %v2884, %v2269
    %v2950 = vsel %vm2935, %v2885, %v2271
    %v2951 = vsel %vm2935, %v2886, %v2273
    %v2952 = vsel %vm2935, %v2887, %v2275
    %v2953 = vsel %vm2935, %v2888, %v2277
    %v2954 = vsel %vm2935, %v2889, %v2279
    %v2955 = vsel %vm2935, %v2890, %v2281
    %v2956 = vsel %vm2935, %v2891, %v2283
    %v2957 = vsel %vm2935, %v2892, %v2285
    %v2958 = vsel %vm2935, %v2893, %v2287
    %v2959 = vsel %vm2935, %v2894, %v2289
    %v2960 = vsel %vm2935, %v2895, %v2291
    %v2961 = vsel %vm2935, %v2896, %v2293
    %v2962 = vsel %vm2935, %v2897, %v2295
    %v2963 = vsel %vm2935, %v2898, %v2297
    %v2964 = vsel %vm2935, %v2899, %v2299
    %v2965 = vsel %vm2935, %v2900, %v2301
    %v2966 = vsel %vm2935, %v2901, %v2303
    %v2967 = vsel %vm2935, %v2902, %v2305
    %v2968 = vsel %vm2935, %v2903, %v2307
    %v2969 = vsel %vm2935, %v2904, %v2309
    %v2970 = vsel %vm2935, %v2905, %v2311
    %v2971 = vsel %vm2935, %v2906, %v2313
    %v2972 = vsel %vm2935, %v2907, %v2315
    %v2973 = vsel %vm2935, %v2908, %v2317
    %v2974 = vsel %vm2935, %v2909, %v2319
    %v2975 = vsel %vm2935, %v2910, %v2321
    %v2976 = vsel %vm2935, %v2911, %v2323
    %v2977 = vsel %vm2935, %v2912, %v2325
    %v2978 = vsel %vm2935, %v2913, %v2327
    %v2979 = vsel %vm2935, %v2914, %v2329
    %v2980 = vsel %vm2935, %v2915, %v2331
    %v2981 = vsel %vm2935, %v2916, %v2333
    %v2982 = vsel %vm2935, %v2917, %v2335
    %v2983 = vsel %vm2935, %v2918, %v2337
    %v2984 = vsel %vm2935, %v2919, %v2339
    %v2985 = vsel %vm2935, %v2920, %v2341
    %v2986 = vsel %vm2935, %v2921, %v2343
    %v2987 = vsel %vm2935, %v2922, %v2345
    %v2988 = vsel %vm2935, %v2923, %v2347
    %v2989 = vsel %vm2935, %v2924, %v2349
    %v2990 = vsel %vm2935, %v2925, %v2351
    %v2991 = vsel %vm2935, %v2926, %v2353
    %v2992 = vsel %vm2935, %v2927, %v2355
    %v2993 = vsel %vm2935, %v2928, %v2357
    %v2994 = vsel %vm2935, %v2929, %v2359
    %v2995 = vsel %vm2935, %v2930, %v2361
    %v2996 = vsel %vm2935, %v2931, %v2363
    %v2997 = vsel %vm2935, %v2932, %v2365
    %v2998 = vsel %vm2935, %v2933, %v2303
    %v2999 = vsel %vm2935, %v2934, %v2305
    %vm3000 = vcmask 916480
    %v3001 = vsel %vm3000, %v2936, %v2429
    %v3002 = vsel %vm3000, %v2937, %v2431
    %v3003 = vsel %vm3000, %v2938, %v2433
    %v3004 = vsel %vm3000, %v2939, %v2435
    %v3005 = vsel %vm3000, %v2940, %v2437
    %v3006 = vsel %vm3000, %v2941, %v2439
    %v3007 = vsel %vm3000, %v2942, %v2441
    %v3008 = vsel %vm3000, %v2943, %v2443
    %v3009 = vsel %vm3000, %v2944, %v2445
    %v3010 = vsel %vm3000, %v2945, %v2447
    %v3011 = vsel %vm3000, %v2946, %v2449
    %v3012 = vsel %vm3000, %v2947, %v2451
    %v3013 = vsel %vm3000, %v2948, %v2453
    %v3014 = vsel %vm3000, %v2949, %v2455
    %v3015 = vsel %vm3000, %v2950, %v2457
    %v3016 = vsel %vm3000, %v2951, %v2459
    %v3017 = vsel %vm3000, %v2952, %v2461
    %v3018 = vsel %vm3000, %v2953, %v2463
    %v3019 = vsel %vm3000, %v2954, %v2465
    %v3020 = vsel %vm3000, %v2955, %v2467
    %v3021 = vsel %vm3000, %v2956, %v2469
    %v3022 = vsel %vm3000, %v2957, %v2471
    %v3023 = vsel %vm3000, %v2958, %v2473
    %v3024 = vsel %vm3000, %v2959, %v2475
    %v3025 = vsel %vm3000, %v2960, %v2477
    %v3026 = vsel %vm3000, %v2961, %v2479
    %v3027 = vsel %vm3000, %v2962, %v2481
    %v3028 = vsel %vm3000, %v2963, %v2483
    %v3029 = vsel %vm3000, %v2964, %v2485
    %v3030 = vsel %vm3000, %v2965, %v2487
    %v3031 = vsel %vm3000, %v2966, %v2489
    %v3032 = vsel %vm3000, %v2967, %v2491
    %v3033 = vsel %vm3000, %v2968, %v2493
    %v3034 = vsel %vm3000, %v2969, %v2495
    %v3035 = vsel %vm3000, %v2970, %v2497
    %v3036 = vsel %vm3000, %v2971, %v2499
    %v3037 = vsel %vm3000, %v2972, %v2501
    %v3038 = vsel %vm3000, %v2973, %v2503
    %v3039 = vsel %vm3000, %v2974, %v2505
    %v3040 = vsel %vm3000, %v2975, %v2507
    %v3041 = vsel %vm3000, %v2976, %v2509
    %v3042 = vsel %vm3000, %v2977, %v2511
    %v3043 = vsel %vm3000, %v2978, %v2513
    %v3044 = vsel %vm3000, %v2979, %v2515
    %v3045 = vsel %vm3000, %v2980, %v2517
    %v3046 = vsel %vm3000, %v2981, %v2519
    %v3047 = vsel %vm3000, %v2982, %v2521
    %v3048 = vsel %vm3000, %v2983, %v2523
    %v3049 = vsel %vm3000, %v2984, %v2525
    %v3050 = vsel %vm3000, %v2985, %v2527
    %v3051 = vsel %vm3000, %v2986, %v2529
    %v3052 = vsel %vm3000, %v2987, %v2531
    %v3053 = vsel %vm3000, %v2988, %v2533
    %v3054 = vsel %vm3000, %v2989, %v2535
    %v3055 = vsel %vm3000, %v2990, %v2537
    %v3056 = vsel %vm3000, %v2991, %v2539
    %v3057 = vsel %vm3000, %v2992, %v2541
    %v3058 = vsel %vm3000, %v2993, %v2543
    %v3059 = vsel %vm3000, %v2994, %v2545
    %v3060 = vsel %vm3000, %v2995, %v2547
    %v3061 = vsel %vm3000, %v2996, %v2549
    %v3062 = vsel %vm3000, %v2997, %v2551
    %v3063 = vsel %vm3000, %v2998, %v2489
    %v3064 = vsel %vm3000, %v2999, %v2491
    %v3065 = vld [vmem:[%s3] sm:$0xff]
    %v3066 = vld [vmem:[%s3 + $0x8] sm:$0xff]
    %v3067 = vld [vmem:[%s3 + $0x10] sm:$0xff]
    %v3068 = vld [vmem:[%s3 + $0x18] sm:$0xff]
    %v3069 = vld [vmem:[%s3 + $0x20] sm:$0xff]
    %v3070 = vld [vmem:[%s3 + $0x28] sm:$0xff]
    %v3071 = vld [vmem:[%s3 + $0x30] sm:$0xff]
    %v3072 = vld [vmem:[%s3 + $0x38] sm:$0xff]
    %v3073 = vld [vmem:[%s3 + $0x40] sm:$0xff]
    %v3074 = vld [vmem:[%s3 + $0x48] sm:$0xff]
    %v3075 = vld [vmem:[%s3 + $0x50] sm:$0xff]
    %v3076 = vld [vmem:[%s3 + $0x58] sm:$0xff]
    %v3077 = vld [vmem:[%s3 + $0x60] sm:$0xff]
    %v3078 = vld [vmem:[%s3 + $0x68] sm:$0xff]
    %v3079 = vld [vmem:[%s3 + $0x70] sm:$0xff]
    %v3080 = vld [vmem:[%s3 + $0x78] sm:$0xff]
    %v3081 = vld [vmem:[%s3 + $0x80] sm:$0xff]
    %v3082 = vld [vmem:[%s3 + $0x88] sm:$0xff]
    %v3083 = vld [vmem:[%s4] sm:$0x1]
    %v3085 = vperm.slane %v3083, 0
    %v3087 = vsel %vm2614, %v1127, 0
    %v3089 = vsel %vm2614, %v1129, 0
    %v3091 = vsel %vm2614, %v1132, 0
    %v3093 = vsel %vm2614, %v1134, 0
    %v3095 = vsel %vm2614, %v1137, 0
    %v3097 = vsel %vm2614, %v1139, 0
    %v3099 = vsel %vm2614, %v1142, 0
    %v3101 = vsel %vm2614, %v1144, 0
    %v3103 = vsel %vm2614, %v1147, 0
    %v3105 = vsel %vm2614, %v1149, 0
    %v3107 = vsel %vm2614, %v1152, 0
    %v3109 = vsel %vm2614, %v1154, 0
    %v3111 = vsel %vm2614, %v1157, 0
    %v3113 = vsel %vm2614, %v1159, 0
    %v3115 = vsel %vm2614, %v1162, 0
    %v3117 = vsel %vm2614, %v1164, 0
    %v3119 = vsel %vm2614, %v1167, 0
    %v3121 = vsel %vm2614, %v1169, 0
    %v3123 = vsel %vm2614, %v1172, 0
    %v3125 = vsel %vm2614, %v1174, 0
    %v3127 = vsel %vm2614, %v1177, 0
    %v3129 = vsel %vm2614, %v1179, 0
    %v3131 = vsel %vm2614, %v1182, 0
    %v3133 = vsel %vm2614, %v1184, 0
    %v3135 = vsel %vm2614, %v1187, 0
    %v3137 = vsel %vm2614, %v1189, 0
    %v3139 = vsel %vm2614, %v1192, 0
    %v3141 = vsel %vm2614, %v1194, 0
    %v3143 = vsel %vm2614, %v1286, 0
    %v3145 = vsel %vm2614, %v1288, 0
    %v3147 = vsel %vm2614, %v1117, 0
    %v3149 = vsel %vm2614, %v1119, 0
    %v3151 = vsel %vm2614, %v1202, 0
    %v3153 = vsel %vm2614, %v1204, 0
    %v3155 = vsel %vm2614, %v1207, 0
    %v3157 = vsel %vm2614, %v1209, 0
    %v3159 = vsel %vm2614, %v1212, 0
    %v3161 = vsel %vm2614, %v1214, 0
    %v3163 = vsel %vm2614, %v1217, 0
    %v3165 = vsel %vm2614, %v1219, 0
    %v3167 = vsel %vm2614, %v1222, 0
    %v3169 = vsel %vm2614, %v1224, 0
    %v3171 = vsel %vm2614, %v1227, 0
    %v3173 = vsel %vm2614, %v1229, 0
    %v3175 = vsel %vm2614, %v1232, 0
    %v3177 = vsel %vm2614, %v1234, 0
    %v3179 = vsel %vm2614, %v1237, 0
    %v3181 = vsel %vm2614, %v1239, 0
    %v3183 = vsel %vm2614, %v1242, 0
    %v3185 = vsel %vm2614, %v1244, 0
    %v3187 = vsel %vm2614, %v1247, 0
    %v3189 = vsel %vm2614, %v1249, 0
    %v3191 = vsel %vm2614, %v1252, 0
    %v3193 = vsel %vm2614, %v1254, 0
    %v3195 = vsel %vm2614, %v1257, 0
    %v3197 = vsel %vm2614, %v1259, 0
    %v3199 = vsel %vm2614, %v1262, 0
    %v3201 = vsel %vm2614, %v1264, 0
    %v3203 = vsel %vm2614, %v1267, 0
    %v3205 = vsel %vm2614, %v1269, 0
    %v3207 = vsel %vm2614, %v1291, 0
    %v3209 = vsel %vm2614, %v1293, 0
    %3211 = vmatpush.msra.mxu0 %v3080
    %3212 = vmatpush.msra.mxu0 %v3079
    %3213 = vmatpush.msra.mxu0 %v3078
    %3214 = vmatpush.msra.mxu0 %v3077
    %3215 = vmatpush.msra.mxu0 %v3076
    %3216 = vmatpush.msra.mxu0 %v3075
    %3217 = vmatpush.msra.mxu0 %v3074
    %3218 = vmatpush.msra.mxu0 %v3073
    %3219 = vmatpush.msra.mxu0 %v3072
    %3220 = vmatpush.msra.mxu0 %v3071
    %3221 = vmatpush.msra.mxu0 %v3070
    %3222 = vmatpush.msra.mxu0 %v3069
    %3223 = vmatpush.msra.mxu0 %v3068
    %3224 = vmatpush.msra.mxu0 %v3067
    %3225 = vmatpush.msra.mxu0 %v3066
    %3226 = vmatpush.msra.mxu0 %v3065
    %3227 = vmatmul.f32.gmra.mxu0 %v3001
    %v3228 = vpop.f32.mrf.mxu0
    %v3229 = vadd.f32 %v3085, %v3228
    %3230 = vmatmul.f32.gmra.mxu0 %v3002
    %v3231 = vpop.f32.mrf.mxu0
    %v3232 = vadd.f32 %v3085, %v3231
    %3233 = vmatmul.f32.gmra.mxu0 %v3003
    %v3234 = vpop.f32.mrf.mxu0
    %v3235 = vadd.f32 %v3085, %v3234
    %3236 = vmatmul.f32.gmra.mxu0 %v3004
    %v3237 = vpop.f32.mrf.mxu0
    %v3238 = vadd.f32 %v3085, %v3237
    %3239 = vmatmul.f32.gmra.mxu0 %v3005
    %v3240 = vpop.f32.mrf.mxu0
    %v3241 = vadd.f32 %v3085, %v3240
    %3242 = vmatmul.f32.gmra.mxu0 %v3006
    %v3243 = vpop.f32.mrf.mxu0
    %v3244 = vadd.f32 %v3085, %v3243
    %3245 = vmatmul.f32.gmra.mxu0 %v3007
    %v3246 = vpop.f32.mrf.mxu0
    %v3247 = vadd.f32 %v3085, %v3246
    %3248 = vmatmul.f32.gmra.mxu0 %v3008
    %v3249 = vpop.f32.mrf.mxu0
    %v3250 = vadd.f32 %v3085, %v3249
    %3251 = vmatmul.f32.gmra.mxu0 %v3009
    %v3252 = vpop.f32.mrf.mxu0
    %v3253 = vadd.f32 %v3085, %v3252
    %3254 = vmatmul.f32.gmra.mxu0 %v3010
    %v3255 = vpop.f32.mrf.mxu0
    %v3256 = vadd.f32 %v3085, %v3255
    %3257 = vmatmul.f32.gmra.mxu0 %v3011
    %v3258 = vpop.f32.mrf.mxu0
    %v3259 = vadd.f32 %v3085, %v3258
    %3260 = vmatmul.f32.gmra.mxu0 %v3012
    %v3261 = vpop.f32.mrf.mxu0
    %v3262 = vadd.f32 %v3085, %v3261
    %3263 = vmatmul.f32.gmra.mxu0 %v3013
    %v3264 = vpop.f32.mrf.mxu0
    %v3265 = vadd.f32 %v3085, %v3264
    %3266 = vmatmul.f32.gmra.mxu0 %v3014
    %v3267 = vpop.f32.mrf.mxu0
    %v3268 = vadd.f32 %v3085, %v3267
    %3269 = vmatmul.f32.gmra.mxu0 %v3015
    %v3270 = vpop.f32.mrf.mxu0
    %v3271 = vadd.f32 %v3085, %v3270
    %3272 = vmatmul.f32.gmra.mxu0 %v3016
    %v3273 = vpop.f32.mrf.mxu0
    %v3274 = vadd.f32 %v3085, %v3273
    %3275 = vmatmul.f32.gmra.mxu0 %v3017
    %v3276 = vpop.f32.mrf.mxu0
    %v3277 = vadd.f32 %v3085, %v3276
    %3278 = vmatmul.f32.gmra.mxu0 %v3018
    %v3279 = vpop.f32.mrf.mxu0
    %v3280 = vadd.f32 %v3085, %v3279
    %3281 = vmatmul.f32.gmra.mxu0 %v3019
    %v3282 = vpop.f32.mrf.mxu0
    %v3283 = vadd.f32 %v3085, %v3282
    %3284 = vmatmul.f32.gmra.mxu0 %v3020
    %v3285 = vpop.f32.mrf.mxu0
    %v3286 = vadd.f32 %v3085, %v3285
    %3287 = vmatmul.f32.gmra.mxu0 %v3021
    %v3288 = vpop.f32.mrf.mxu0
    %v3289 = vadd.f32 %v3085, %v3288
    %3290 = vmatmul.f32.gmra.mxu0 %v3022
    %v3291 = vpop.f32.mrf.mxu0
    %v3292 = vadd.f32 %v3085, %v3291
    %3293 = vmatmul.f32.gmra.mxu0 %v3023
    %v3294 = vpop.f32.mrf.mxu0
    %v3295 = vadd.f32 %v3085, %v3294
    %3296 = vmatmul.f32.gmra.mxu0 %v3024
    %v3297 = vpop.f32.mrf.mxu0
    %v3298 = vadd.f32 %v3085, %v3297
    %3299 = vmatmul.f32.gmra.mxu0 %v3025
    %v3300 = vpop.f32.mrf.mxu0
    %v3301 = vadd.f32 %v3085, %v3300
    %3302 = vmatmul.f32.gmra.mxu0 %v3026
    %v3303 = vpop.f32.mrf.mxu0
    %v3304 = vadd.f32 %v3085, %v3303
    %3305 = vmatmul.f32.gmra.mxu0 %v3027
    %v3306 = vpop.f32.mrf.mxu0
    %v3307 = vadd.f32 %v3085, %v3306
    %3308 = vmatmul.f32.gmra.mxu0 %v3028
    %v3309 = vpop.f32.mrf.mxu0
    %v3310 = vadd.f32 %v3085, %v3309
    %3311 = vmatmul.f32.gmra.mxu0 %v3029
    %v3312 = vpop.f32.mrf.mxu0
    %v3313 = vadd.f32 %v3085, %v3312
    %3314 = vmatmul.f32.gmra.mxu0 %v3030
    %v3315 = vpop.f32.mrf.mxu0
    %v3316 = vadd.f32 %v3085, %v3315
    %3317 = vmatmul.f32.gmra.mxu0 %v3031
    %v3318 = vpop.f32.mrf.mxu0
    %v3319 = vadd.f32 %v3085, %v3318
    %3320 = vmatmul.f32.gmra.mxu0 %v3032
    %v3321 = vpop.f32.mrf.mxu0
    %v3322 = vadd.f32 %v3085, %v3321
    %3323 = vmatmul.f32.gmra.mxu0 %v3033
    %v3324 = vpop.f32.mrf.mxu0
    %v3325 = vadd.f32 %v3085, %v3324
    %3326 = vmatmul.f32.gmra.mxu0 %v3034
    %v3327 = vpop.f32.mrf.mxu0
    %v3328 = vadd.f32 %v3085, %v3327
    %3329 = vmatmul.f32.gmra.mxu0 %v3035
    %v3330 = vpop.f32.mrf.mxu0
    %v3331 = vadd.f32 %v3085, %v3330
    %3332 = vmatmul.f32.gmra.mxu0 %v3036
    %v3333 = vpop.f32.mrf.mxu0
    %v3334 = vadd.f32 %v3085, %v3333
    %3335 = vmatmul.f32.gmra.mxu0 %v3037
    %v3336 = vpop.f32.mrf.mxu0
    %v3337 = vadd.f32 %v3085, %v3336
    %3338 = vmatmul.f32.gmra.mxu0 %v3038
    %v3339 = vpop.f32.mrf.mxu0
    %v3340 = vadd.f32 %v3085, %v3339
    %3341 = vmatmul.f32.gmra.mxu0 %v3039
    %v3342 = vpop.f32.mrf.mxu0
    %v3343 = vadd.f32 %v3085, %v3342
    %3344 = vmatmul.f32.gmra.mxu0 %v3040
    %v3345 = vpop.f32.mrf.mxu0
    %v3346 = vadd.f32 %v3085, %v3345
    %3347 = vmatmul.f32.gmra.mxu0 %v3041
    %v3348 = vpop.f32.mrf.mxu0
    %v3349 = vadd.f32 %v3085, %v3348
    %3350 = vmatmul.f32.gmra.mxu0 %v3042
    %v3351 = vpop.f32.mrf.mxu0
    %v3352 = vadd.f32 %v3085, %v3351
    %3353 = vmatmul.f32.gmra.mxu0 %v3043
    %v3354 = vpop.f32.mrf.mxu0
    %v3355 = vadd.f32 %v3085, %v3354
    %3356 = vmatmul.f32.gmra.mxu0 %v3044
    %v3357 = vpop.f32.mrf.mxu0
    %v3358 = vadd.f32 %v3085, %v3357
    %3359 = vmatmul.f32.gmra.mxu0 %v3045
    %v3360 = vpop.f32.mrf.mxu0
    %v3361 = vadd.f32 %v3085, %v3360
    %3362 = vmatmul.f32.gmra.mxu0 %v3046
    %v3363 = vpop.f32.mrf.mxu0
    %v3364 = vadd.f32 %v3085, %v3363
    %3365 = vmatmul.f32.gmra.mxu0 %v3047
    %v3366 = vpop.f32.mrf.mxu0
    %v3367 = vadd.f32 %v3085, %v3366
    %3368 = vmatmul.f32.gmra.mxu0 %v3048
    %v3369 = vpop.f32.mrf.mxu0
    %v3370 = vadd.f32 %v3085, %v3369
    %3371 = vmatmul.f32.gmra.mxu0 %v3049
    %v3372 = vpop.f32.mrf.mxu0
    %v3373 = vadd.f32 %v3085, %v3372
    %3374 = vmatmul.f32.gmra.mxu0 %v3050
    %v3375 = vpop.f32.mrf.mxu0
    %v3376 = vadd.f32 %v3085, %v3375
    %3377 = vmatmul.f32.gmra.mxu0 %v3051
    %v3378 = vpop.f32.mrf.mxu0
    %v3379 = vadd.f32 %v3085, %v3378
    %3380 = vmatmul.f32.gmra.mxu0 %v3052
    %v3381 = vpop.f32.mrf.mxu0
    %v3382 = vadd.f32 %v3085, %v3381
    %3383 = vmatmul.f32.gmra.mxu0 %v3053
    %v3384 = vpop.f32.mrf.mxu0
    %v3385 = vadd.f32 %v3085, %v3384
    %3386 = vmatmul.f32.gmra.mxu0 %v3054
    %v3387 = vpop.f32.mrf.mxu0
    %v3388 = vadd.f32 %v3085, %v3387
    %3389 = vmatmul.f32.gmra.mxu0 %v3055
    %v3390 = vpop.f32.mrf.mxu0
    %v3391 = vadd.f32 %v3085, %v3390
    %3392 = vmatmul.f32.gmra.mxu0 %v3056
    %v3393 = vpop.f32.mrf.mxu0
    %v3394 = vadd.f32 %v3085, %v3393
    %3395 = vmatmul.f32.gmra.mxu0 %v3057
    %v3396 = vpop.f32.mrf.mxu0
    %v3397 = vadd.f32 %v3085, %v3396
    %3398 = vmatmul.f32.gmra.mxu0 %v3058
    %v3399 = vpop.f32.mrf.mxu0
    %v3400 = vadd.f32 %v3085, %v3399
    %3401 = vmatmul.f32.gmra.mxu0 %v3059
    %v3402 = vpop.f32.mrf.mxu0
    %v3403 = vadd.f32 %v3085, %v3402
    %3404 = vmatmul.f32.gmra.mxu0 %v3060
    %v3405 = vpop.f32.mrf.mxu0
    %v3406 = vadd.f32 %v3085, %v3405
    %3407 = vmatmul.f32.gmra.mxu0 %v3061
    %v3408 = vpop.f32.mrf.mxu0
    %v3409 = vadd.f32 %v3085, %v3408
    %3410 = vmatmul.f32.gmra.mxu0 %v3062
    %v3411 = vpop.f32.mrf.mxu0
    %v3412 = vadd.f32 %v3085, %v3411
    %3413 = vmatmul.f32.gmra.mxu0 %v3063
    %v3414 = vpop.f32.mrf.mxu0
    %v3415 = vadd.f32 %v3085, %v3414
    %3416 = vmatmul.f32.gmra.mxu0 %v3064
    %v3417 = vpop.f32.mrf.mxu0
    %v3418 = vadd.f32 %v3085, %v3417
    %3419 = vdwg.mxu0
    %3420 = vmatpush.msra.mxu0 0.0
    %3421 = vmatpush.msra.mxu0 0.0
    %3422 = vmatpush.msra.mxu0 0.0
    %3423 = vmatpush.msra.mxu0 0.0
    %3424 = vmatpush.msra.mxu0 0.0
    %3425 = vmatpush.msra.mxu0 0.0
    %3426 = vmatpush.msra.mxu0 0.0
    %3427 = vmatpush.msra.mxu0 0.0
    %3428 = vmatpush.msra.mxu0 0.0
    %3429 = vmatpush.msra.mxu0 0.0
    %3430 = vmatpush.msra.mxu0 0.0
    %3431 = vmatpush.msra.mxu0 0.0
    %3432 = vmatpush.msra.mxu0 0.0
    %3433 = vmatpush.msra.mxu0 0.0
    %3434 = vmatpush.msra.mxu0 %v3082
    %3435 = vmatpush.msra.mxu0 %v3081
    %3436 = vmatmul.f32.gmra.mxu0 %v3087
    %v3437 = vpop.f32.mrf.mxu0
    %v3438 = vadd.f32 %v3229, %v3437
    %3439 = vmatmul.f32.gmra.mxu0 %v3089
    %v3440 = vpop.f32.mrf.mxu0
    %v3441 = vadd.f32 %v3232, %v3440
    %3442 = vmatmul.f32.gmra.mxu0 %v3091
    %v3443 = vpop.f32.mrf.mxu0
    %v3444 = vadd.f32 %v3235, %v3443
    %3445 = vmatmul.f32.gmra.mxu0 %v3093
    %v3446 = vpop.f32.mrf.mxu0
    %v3447 = vadd.f32 %v3238, %v3446
    %3448 = vmatmul.f32.gmra.mxu0 %v3095
    %v3449 = vpop.f32.mrf.mxu0
    %v3450 = vadd.f32 %v3241, %v3449
    %3451 = vmatmul.f32.gmra.mxu0 %v3097
    %v3452 = vpop.f32.mrf.mxu0
    %v3453 = vadd.f32 %v3244, %v3452
    %3454 = vmatmul.f32.gmra.mxu0 %v3099
    %v3455 = vpop.f32.mrf.mxu0
    %v3456 = vadd.f32 %v3247, %v3455
    %3457 = vmatmul.f32.gmra.mxu0 %v3101
    %v3458 = vpop.f32.mrf.mxu0
    %v3459 = vadd.f32 %v3250, %v3458
    %3460 = vmatmul.f32.gmra.mxu0 %v3103
    %v3461 = vpop.f32.mrf.mxu0
    %v3462 = vadd.f32 %v3253, %v3461
    %3463 = vmatmul.f32.gmra.mxu0 %v3105
    %v3464 = vpop.f32.mrf.mxu0
    %v3465 = vadd.f32 %v3256, %v3464
    %3466 = vmatmul.f32.gmra.mxu0 %v3107
    %v3467 = vpop.f32.mrf.mxu0
    %v3468 = vadd.f32 %v3259, %v3467
    %3469 = vmatmul.f32.gmra.mxu0 %v3109
    %v3470 = vpop.f32.mrf.mxu0
    %v3471 = vadd.f32 %v3262, %v3470
    %3472 = vmatmul.f32.gmra.mxu0 %v3111
    %v3473 = vpop.f32.mrf.mxu0
    %v3474 = vadd.f32 %v3265, %v3473
    %3475 = vmatmul.f32.gmra.mxu0 %v3113
    %v3476 = vpop.f32.mrf.mxu0
    %v3477 = vadd.f32 %v3268, %v3476
    %3478 = vmatmul.f32.gmra.mxu0 %v3115
    %v3479 = vpop.f32.mrf.mxu0
    %v3480 = vadd.f32 %v3271, %v3479
    %3481 = vmatmul.f32.gmra.mxu0 %v3117
    %v3482 = vpop.f32.mrf.mxu0
    %v3483 = vadd.f32 %v3274, %v3482
    %3484 = vmatmul.f32.gmra.mxu0 %v3119
    %v3485 = vpop.f32.mrf.mxu0
    %v3486 = vadd.f32 %v3277, %v3485
    %3487 = vmatmul.f32.gmra.mxu0 %v3121
    %v3488 = vpop.f32.mrf.mxu0
    %v3489 = vadd.f32 %v3280, %v3488
    %3490 = vmatmul.f32.gmra.mxu0 %v3123
    %v3491 = vpop.f32.mrf.mxu0
    %v3492 = vadd.f32 %v3283, %v3491
    %3493 = vmatmul.f32.gmra.mxu0 %v3125
    %v3494 = vpop.f32.mrf.mxu0
    %v3495 = vadd.f32 %v3286, %v3494
    %3496 = vmatmul.f32.gmra.mxu0 %v3127
    %v3497 = vpop.f32.mrf.mxu0
    %v3498 = vadd.f32 %v3289, %v3497
    %3499 = vmatmul.f32.gmra.mxu0 %v3129
    %v3500 = vpop.f32.mrf.mxu0
    %v3501 = vadd.f32 %v3292, %v3500
    %3502 = vmatmul.f32.gmra.mxu0 %v3131
    %v3503 = vpop.f32.mrf.mxu0
    %v3504 = vadd.f32 %v3295, %v3503
    %3505 = vmatmul.f32.gmra.mxu0 %v3133
    %v3506 = vpop.f32.mrf.mxu0
    %v3507 = vadd.f32 %v3298, %v3506
    %3508 = vmatmul.f32.gmra.mxu0 %v3135
    %v3509 = vpop.f32.mrf.mxu0
    %v3510 = vadd.f32 %v3301, %v3509
    %3511 = vmatmul.f32.gmra.mxu0 %v3137
    %v3512 = vpop.f32.mrf.mxu0
    %v3513 = vadd.f32 %v3304, %v3512
    %3514 = vmatmul.f32.gmra.mxu0 %v3139
    %v3515 = vpop.f32.mrf.mxu0
    %v3516 = vadd.f32 %v3307, %v3515
    %3517 = vmatmul.f32.gmra.mxu0 %v3141
    %v3518 = vpop.f32.mrf.mxu0
    %v3519 = vadd.f32 %v3310, %v3518
    %3520 = vmatmul.f32.gmra.mxu0 %v3143
    %v3521 = vpop.f32.mrf.mxu0
    %v3522 = vadd.f32 %v3313, %v3521
    %3523 = vmatmul.f32.gmra.mxu0 %v3145
    %v3524 = vpop.f32.mrf.mxu0
    %v3525 = vadd.f32 %v3316, %v3524
    %3526 = vmatmul.f32.gmra.mxu0 %v3147
    %v3527 = vpop.f32.mrf.mxu0
    %v3528 = vadd.f32 %v3319, %v3527
    %3529 = vmatmul.f32.gmra.mxu0 %v3149
    %v3530 = vpop.f32.mrf.mxu0
    %v3531 = vadd.f32 %v3322, %v3530
    %3532 = vmatmul.f32.gmra.mxu0 %v3151
    %v3533 = vpop.f32.mrf.mxu0
    %v3534 = vadd.f32 %v3325, %v3533
    %3535 = vmatmul.f32.gmra.mxu0 %v3153
    %v3536 = vpop.f32.mrf.mxu0
    %v3537 = vadd.f32 %v3328, %v3536
    %3538 = vmatmul.f32.gmra.mxu0 %v3155
    %v3539 = vpop.f32.mrf.mxu0
    %v3540 = vadd.f32 %v3331, %v3539
    %3541 = vmatmul.f32.gmra.mxu0 %v3157
    %v3542 = vpop.f32.mrf.mxu0
    %v3543 = vadd.f32 %v3334, %v3542
    %3544 = vmatmul.f32.gmra.mxu0 %v3159
    %v3545 = vpop.f32.mrf.mxu0
    %v3546 = vadd.f32 %v3337, %v3545
    %3547 = vmatmul.f32.gmra.mxu0 %v3161
    %v3548 = vpop.f32.mrf.mxu0
    %v3549 = vadd.f32 %v3340, %v3548
    %3550 = vmatmul.f32.gmra.mxu0 %v3163
    %v3551 = vpop.f32.mrf.mxu0
    %v3552 = vadd.f32 %v3343, %v3551
    %3553 = vmatmul.f32.gmra.mxu0 %v3165
    %v3554 = vpop.f32.mrf.mxu0
    %v3555 = vadd.f32 %v3346, %v3554
    %3556 = vmatmul.f32.gmra.mxu0 %v3167
    %v3557 = vpop.f32.mrf.mxu0
    %v3558 = vadd.f32 %v3349, %v3557
    %3559 = vmatmul.f32.gmra.mxu0 %v3169
    %v3560 = vpop.f32.mrf.mxu0
    %v3561 = vadd.f32 %v3352, %v3560
    %3562 = vmatmul.f32.gmra.mxu0 %v3171
    %v3563 = vpop.f32.mrf.mxu0
    %v3564 = vadd.f32 %v3355, %v3563
    %3565 = vmatmul.f32.gmra.mxu0 %v3173
    %v3566 = vpop.f32.mrf.mxu0
    %v3567 = vadd.f32 %v3358, %v3566
    %3568 = vmatmul.f32.gmra.mxu0 %v3175
    %v3569 = vpop.f32.mrf.mxu0
    %v3570 = vadd.f32 %v3361, %v3569
    %3571 = vmatmul.f32.gmra.mxu0 %v3177
    %v3572 = vpop.f32.mrf.mxu0
    %v3573 = vadd.f32 %v3364, %v3572
    %3574 = vmatmul.f32.gmra.mxu0 %v3179
    %v3575 = vpop.f32.mrf.mxu0
    %v3576 = vadd.f32 %v3367, %v3575
    %3577 = vmatmul.f32.gmra.mxu0 %v3181
    %v3578 = vpop.f32.mrf.mxu0
    %v3579 = vadd.f32 %v3370, %v3578
    %3580 = vmatmul.f32.gmra.mxu0 %v3183
    %v3581 = vpop.f32.mrf.mxu0
    %v3582 = vadd.f32 %v3373, %v3581
    %3583 = vmatmul.f32.gmra.mxu0 %v3185
    %v3584 = vpop.f32.mrf.mxu0
    %v3585 = vadd.f32 %v3376, %v3584
    %3586 = vmatmul.f32.gmra.mxu0 %v3187
    %v3587 = vpop.f32.mrf.mxu0
    %v3588 = vadd.f32 %v3379, %v3587
    %3589 = vmatmul.f32.gmra.mxu0 %v3189
    %v3590 = vpop.f32.mrf.mxu0
    %v3591 = vadd.f32 %v3382, %v3590
    %3592 = vmatmul.f32.gmra.mxu0 %v3191
    %v3593 = vpop.f32.mrf.mxu0
    %v3594 = vadd.f32 %v3385, %v3593
    %3595 = vmatmul.f32.gmra.mxu0 %v3193
    %v3596 = vpop.f32.mrf.mxu0
    %v3597 = vadd.f32 %v3388, %v3596
    %3598 = vmatmul.f32.gmra.mxu0 %v3195
    %v3599 = vpop.f32.mrf.mxu0
    %v3600 = vadd.f32 %v3391, %v3599
    %3601 = vmatmul.f32.gmra.mxu0 %v3197
    %v3602 = vpop.f32.mrf.mxu0
    %v3603 = vadd.f32 %v3394, %v3602
    %3604 = vmatmul.f32.gmra.mxu0 %v3199
    %v3605 = vpop.f32.mrf.mxu0
    %v3606 = vadd.f32 %v3397, %v3605
    %3607 = vmatmul.f32.gmra.mxu0 %v3201
    %v3608 = vpop.f32.mrf.mxu0
    %v3609 = vadd.f32 %v3400, %v3608
    %3610 = vmatmul.f32.gmra.mxu0 %v3203
    %v3611 = vpop.f32.mrf.mxu0
    %v3612 = vadd.f32 %v3403, %v3611
    %3613 = vmatmul.f32.gmra.mxu0 %v3205
    %v3614 = vpop.f32.mrf.mxu0
    %v3615 = vadd.f32 %v3406, %v3614
    %3616 = vmatmul.f32.gmra.mxu0 %v3207
    %v3617 = vpop.f32.mrf.mxu0
    %v3618 = vadd.f32 %v3409, %v3617
    %3619 = vmatmul.f32.gmra.mxu0 %v3209
    %v3620 = vpop.f32.mrf.mxu0
    %v3621 = vadd.f32 %v3412, %v3620
    %3622 = vmatmul.f32.gmra.mxu0 %v3147
    %v3623 = vpop.f32.mrf.mxu0
    %v3624 = vadd.f32 %v3415, %v3623
    %3625 = vmatmul.f32.gmra.mxu0 %v3149
    %v3626 = vpop.f32.mrf.mxu0
    %v3627 = vadd.f32 %v3418, %v3626
    %3628 = vdwg.mxu0
    %v3629 = vmax.f32 %v3438, 0.0
    %v3630 = vmax.f32 %v3441, 0.0
    %v3631 = vmax.f32 %v3444, 0.0
    %v3632 = vmax.f32 %v3447, 0.0
    %v3633 = vmax.f32 %v3450, 0.0
    %v3634 = vmax.f32 %v3453, 0.0
    %v3635 = vmax.f32 %v3456, 0.0
    %v3636 = vmax.f32 %v3459, 0.0
    %v3637 = vmax.f32 %v3462, 0.0
    %v3638 = vmax.f32 %v3465, 0.0
    %v3639 = vmax.f32 %v3468, 0.0
    %v3640 = vmax.f32 %v3471, 0.0
    %v3641 = vmax.f32 %v3474, 0.0
    %v3642 = vmax.f32 %v3477, 0.0
    %v3643 = vmax.f32 %v3480, 0.0
    %v3644 = vmax.f32 %v3483, 0.0
    %v3645 = vmax.f32 %v3486, 0.0
    %v3646 = vmax.f32 %v3489, 0.0
    %v3647 = vmax.f32 %v3492, 0.0
    %v3648 = vmax.f32 %v3495, 0.0
    %v3649 = vmax.f32 %v3498, 0.0
    %v3650 = vmax.f32 %v3501, 0.0
    %v3651 = vmax.f32 %v3504, 0.0
    %v3652 = vmax.f32 %v3507, 0.0
    %v3653 = vmax.f32 %v3510, 0.0
    %v3654 = vmax.f32 %v3513, 0.0
    %v3655 = vmax.f32 %v3516, 0.0
    %v3656 = vmax.f32 %v3519, 0.0
    %v3657 = vmax.f32 %v3522, 0.0
    %v3658 = vmax.f32 %v3525, 0.0
    %v3659 = vmax.f32 %v3528, 0.0
    %v3660 = vmax.f32 %v3531, 0.0
    %v3661 = vmax.f32 %v3534, 0.0
    %v3662 = vmax.f32 %v3537, 0.0
    %v3663 = vmax.f32 %v3540, 0.0
    %v3664 = vmax.f32 %v3543, 0.0
    %v3665 = vmax.f32 %v3546, 0.0
    %v3666 = vmax.f32 %v3549, 0.0
    %v3667 = vmax.f32 %v3552, 0.0
    %v3668 = vmax.f32 %v3555, 0.0
    %v3669 = vmax.f32 %v3558, 0.0
    %v3670 = vmax.f32 %v3561, 0.0
    %v3671 = vmax.f32 %v3564, 0.0
    %v3672 = vmax.f32 %v3567, 0.0
    %v3673 = vmax.f32 %v3570, 0.0
    %v3674 = vmax.f32 %v3573, 0.0
    %v3675 = vmax.f32 %v3576, 0.0
    %v3676 = vmax.f32 %v3579, 0.0
    %v3677 = vmax.f32 %v3582, 0.0
    %v3678 = vmax.f32 %v3585, 0.0
    %v3679 = vmax.f32 %v3588, 0.0
    %v3680 = vmax.f32 %v3591, 0.0
    %v3681 = vmax.f32 %v3594, 0.0
    %v3682 = vmax.f32 %v3597, 0.0
    %v3683 = vmax.f32 %v3600, 0.0
    %v3684 = vmax.f32 %v3603, 0.0
    %v3685 = vmax.f32 %v3606, 0.0
    %v3686 = vmax.f32 %v3609, 0.0
    %v3687 = vmax.f32 %v3612, 0.0
    %v3688 = vmax.f32 %v3615, 0.0
    %v3689 = vmax.f32 %v3618, 0.0
    %v3690 = vmax.f32 %v3621, 0.0
    %v3691 = vmax.f32 %v3624, 0.0
    %v3692 = vmax.f32 %v3627, 0.0
    %v3693 = vsel %vm2677, %v3629, 0.0
    %v3694 = vsel %vm2677, %v3630, 0.0
    %v3695 = vadd.f32 %v3693, %v3694
    %v3696 = vsel %vm2677, %v3631, 0.0
    %v3697 = vadd.f32 %v3695, %v3696
    %v3698 = vsel %vm2677, %v3632, 0.0
    %v3699 = vadd.f32 %v3697, %v3698
    %v3700 = vsel %vm2677, %v3633, 0.0
    %v3701 = vadd.f32 %v3699, %v3700
    %v3702 = vsel %vm2677, %v3634, 0.0
    %v3703 = vadd.f32 %v3701, %v3702
    %v3704 = vsel %vm2677, %v3635, 0.0
    %v3705 = vadd.f32 %v3703, %v3704
    %v3706 = vsel %vm2677, %v3636, 0.0
    %v3707 = vadd.f32 %v3705, %v3706
    %v3708 = vsel %vm2677, %v3637, 0.0
    %v3709 = vadd.f32 %v3707, %v3708
    %v3710 = vsel %vm2677, %v3638, 0.0
    %v3711 = vadd.f32 %v3709, %v3710
    %v3712 = vsel %vm2677, %v3639, 0.0
    %v3713 = vadd.f32 %v3711, %v3712
    %v3714 = vsel %vm2677, %v3640, 0.0
    %v3715 = vadd.f32 %v3713, %v3714
    %v3716 = vsel %vm2677, %v3641, 0.0
    %v3717 = vadd.f32 %v3715, %v3716
    %v3718 = vsel %vm2677, %v3642, 0.0
    %v3719 = vadd.f32 %v3717, %v3718
    %v3720 = vsel %vm2677, %v3643, 0.0
    %v3721 = vadd.f32 %v3719, %v3720
    %v3722 = vsel %vm2677, %v3644, 0.0
    %v3723 = vadd.f32 %v3721, %v3722
    %v3724 = vsel %vm2677, %v3645, 0.0
    %v3725 = vadd.f32 %v3723, %v3724
    %v3726 = vsel %vm2677, %v3646, 0.0
    %v3727 = vadd.f32 %v3725, %v3726
    %v3728 = vsel %vm2677, %v3647, 0.0
    %v3729 = vadd.f32 %v3727, %v3728
    %v3730 = vsel %vm2677, %v3648, 0.0
    %v3731 = vadd.f32 %v3729, %v3730
    %v3732 = vsel %vm2677, %v3649, 0.0
    %v3733 = vadd.f32 %v3731, %v3732
    %v3734 = vsel %vm2677, %v3650, 0.0
    %v3735 = vadd.f32 %v3733, %v3734
    %v3736 = vsel %vm2677, %v3651, 0.0
    %v3737 = vadd.f32 %v3735, %v3736
    %v3738 = vsel %vm2677, %v3652, 0.0
    %v3739 = vadd.f32 %v3737, %v3738
    %v3740 = vsel %vm2677, %v3653, 0.0
    %v3741 = vadd.f32 %v3739, %v3740
    %v3742 = vsel %vm2677, %v3654, 0.0
    %v3743 = vadd.f32 %v3741, %v3742
    %v3744 = vsel %vm2677, %v3655, 0.0
    %v3745 = vadd.f32 %v3743, %v3744
    %v3746 = vsel %vm2677, %v3656, 0.0
    %v3747 = vadd.f32 %v3745, %v3746
    %v3748 = vsel %vm2677, %v3657, 0.0
    %v3749 = vadd.f32 %v3747, %v3748
    %v3750 = vsel %vm2677, %v3658, 0.0
    %v3751 = vadd.f32 %v3749, %v3750
    %v3752 = vsel %vm2677, %v3659, 0.0
    %v3753 = vadd.f32 %v3751, %v3752
    %v3754 = vsel %vm2677, %v3660, 0.0
    %v3755 = vadd.f32 %v3753, %v3754
    %v3756 = vrot.slane %v3755, 4
    %v3757 = vadd.f32 %v3755, %v3756
    %v3758 = vrot.slane %v3757, 2
    %v3759 = vadd.f32 %v3757, %v3758
    %v3760 = vrot.slane %v3759, 1
    %v3761 = vadd.f32 %v3759, %v3760
    %v3762 = vsel %vm2677, %v3661, 0.0
    %v3763 = vsel %vm2677, %v3662, 0.0
    %v3764 = vadd.f32 %v3762, %v3763
    %v3765 = vsel %vm2677, %v3663, 0.0
    %v3766 = vadd.f32 %v3764, %v3765
    %v3767 = vsel %vm2677, %v3664, 0.0
    %v3768 = vadd.f32 %v3766, %v3767
    %v3769 = vsel %vm2677, %v3665, 0.0
    %v3770 = vadd.f32 %v3768, %v3769
    %v3771 = vsel %vm2677, %v3666, 0.0
    %v3772 = vadd.f32 %v3770, %v3771
    %v3773 = vsel %vm2677, %v3667, 0.0
    %v3774 = vadd.f32 %v3772, %v3773
    %v3775 = vsel %vm2677, %v3668, 0.0
    %v3776 = vadd.f32 %v3774, %v3775
    %v3777 = vsel %vm2677, %v3669, 0.0
    %v3778 = vadd.f32 %v3776, %v3777
    %v3779 = vsel %vm2677, %v3670, 0.0
    %v3780 = vadd.f32 %v3778, %v3779
    %v3781 = vsel %vm2677, %v3671, 0.0
    %v3782 = vadd.f32 %v3780, %v3781
    %v3783 = vsel %vm2677, %v3672, 0.0
    %v3784 = vadd.f32 %v3782, %v3783
    %v3785 = vsel %vm2677, %v3673, 0.0
    %v3786 = vadd.f32 %v3784, %v3785
    %v3787 = vsel %vm2677, %v3674, 0.0
    %v3788 = vadd.f32 %v3786, %v3787
    %v3789 = vsel %vm2677, %v3675, 0.0
    %v3790 = vadd.f32 %v3788, %v3789
    %v3791 = vsel %vm2677, %v3676, 0.0
    %v3792 = vadd.f32 %v3790, %v3791
    %v3793 = vsel %vm2677, %v3677, 0.0
    %v3794 = vadd.f32 %v3792, %v3793
    %v3795 = vsel %vm2677, %v3678, 0.0
    %v3796 = vadd.f32 %v3794, %v3795
    %v3797 = vsel %vm2677, %v3679, 0.0
    %v3798 = vadd.f32 %v3796, %v3797
    %v3799 = vsel %vm2677, %v3680, 0.0
    %v3800 = vadd.f32 %v3798, %v3799
    %v3801 = vsel %vm2677, %v3681, 0.0
    %v3802 = vadd.f32 %v3800, %v3801
    %v3803 = vsel %vm2677, %v3682, 0.0
    %v3804 = vadd.f32 %v3802, %v3803
    %v3805 = vsel %vm2677, %v3683, 0.0
    %v3806 = vadd.f32 %v3804, %v3805
    %v3807 = vsel %vm2677, %v3684, 0.0
    %v3808 = vadd.f32 %v3806, %v3807
    %v3809 = vsel %vm2677, %v3685, 0.0
    %v3810 = vadd.f32 %v3808, %v3809
    %v3811 = vsel %vm2677, %v3686, 0.0
    %v3812 = vadd.f32 %v3810, %v3811
    %v3813 = vsel %vm2677, %v3687, 0.0
    %v3814 = vadd.f32 %v3812, %v3813
    %v3815 = vsel %vm2677, %v3688, 0.0
    %v3816 = vadd.f32 %v3814, %v3815
    %v3817 = vsel %vm2677, %v3689, 0.0
    %v3818 = vadd.f32 %v3816, %v3817
    %v3819 = vsel %vm2677, %v3690, 0.0
    %v3820 = vadd.f32 %v3818, %v3819
    %v3821 = vsel %vm2677, %v3691, 0.0
    %v3822 = vadd.f32 %v3820, %v3821
    %v3823 = vsel %vm2677, %v3692, 0.0
    %v3824 = vadd.f32 %v3822, %v3823
    %v3825 = vrot.slane %v3824, 4
    %v3826 = vadd.f32 %v3824, %v3825
    %v3827 = vrot.slane %v3826, 2
    %v3828 = vadd.f32 %v3826, %v3827
    %v3829 = vrot.slane %v3828, 1
    %v3830 = vadd.f32 %v3828, %v3829
    %v3831 = vsel %vm635, %v3761, %v3830
    %v3832 = vmul.f32 %v3831, 0.00390625
    %v3833 = vld [vmem:[%s5] sm:$0xff]
    %v3834 = vld [vmem:[%s5 + $0x8] sm:$0xff]
    %v3835 = vld [vmem:[%s5 + $0x10] sm:$0xff]
    %v3836 = vld [vmem:[%s5 + $0x18] sm:$0xff]
    %v3837 = vld [vmem:[%s6] sm:$0x1]
    %v3839 = vperm.slane %v3837, 0
    %v3842 = vsel %vm2677, %v3832, 0
    %3844 = vmatpush.msra.mxu0 0.0
    %3845 = vmatpush.msra.mxu0 0.0
    %3846 = vmatpush.msra.mxu0 0.0
    %3847 = vmatpush.msra.mxu0 0.0
    %3848 = vmatpush.msra.mxu0 0.0
    %3849 = vmatpush.msra.mxu0 0.0
    %3850 = vmatpush.msra.mxu0 0.0
    %3851 = vmatpush.msra.mxu0 0.0
    %3852 = vmatpush.msra.mxu0 0.0
    %3853 = vmatpush.msra.mxu0 0.0
    %3854 = vmatpush.msra.mxu0 0.0
    %3855 = vmatpush.msra.mxu0 0.0
    %3856 = vmatpush.msra.mxu0 %v3836
    %3857 = vmatpush.msra.mxu0 %v3835
    %3858 = vmatpush.msra.mxu0 %v3834
    %3859 = vmatpush.msra.mxu0 %v3833
    %3860 = vmatmul.f32.gmra.mxu0 %v3842
    %v3861 = vpop.f32.mrf.mxu0
    %v3862 = vadd.f32 %v3839, %v3861
    %3863 = vdwg.mxu0
    %3864 = vst [vmem:[#allocation2] sm:$0x3] %v3862
    // Predicated region
    $region30: #{pretrained_forward.1} parent=1 // pred_check
      _
    $region31: #{pretrained_forward.1} parent=1 // pred_check_branch
      %3866 = sbr.rel (0) target = $region33
    $region32: #{pretrained_forward.1} parent=1 // pred_region
      %3868 = vsyncadd [#allocation3], 0
      %s3870 = sshll.u32 [#allocation2], 4
      %s3871 = int_to_ptr.vmem [resolvable:$true] %s3870
      %s3872 = sshll.u32 %s7, 4
      %s3873 = int_to_ptr.hbm [resolvable:$true] %s3872
      %3875 = dma.vmem_to_hbm [thread:$0]  %s3871, 32, %s3873, [#allocation3]
    $region33: #{pretrained_forward.1} parent=1 // pred_fallthru
      _
    // Predicated region
    $region34: #{pretrained_forward.1} parent=1 // pred_check
      _
    $region35: #{pretrained_forward.1} parent=1 // pred_check_branch
      %3877 = sbr.rel (0) target = $region37
    $region36: #{pretrained_forward.1} parent=1 // pred_region
      %3879 = dma.done [#allocation3], 32
    $region37: #{pretrained_forward.1} parent=1 // pred_fallthru
      _
    %3880 = vsyncpa [#allocation3], 1

</llo_original>
